<compile_context>
chip_gen: v7x
topology: tpu7x:2x2x1
jax: 0.10.0
libtpu: 0.0.40
codegen_flags: <defaults>
</compile_context>

<pallas_src>
import functools

import jax
import jax.numpy as jnp
from jax import lax
from jax.experimental import pallas as pl
from jax.experimental.pallas import tpu as pltpu


def _round_up(a, m):
    return ((a + m - 1) // m) * m


def _mxu_width_guess():
    try:
        kind = jax.devices()[0].device_kind.lower()
    except Exception:
        return 256
    for tag in ("v2", "v3", "v4", "v5"):
        if tag in kind:
            return 128
    return 256


def _choose_tiling(v, t, max_lanes=256, mxu=256):
    """Pick (v_pad, t_tile, lanes): lanes = t_tile*v_pad, lanes % 128 == 0,
    v_pad % 8 == 0, lanes <= max_lanes (unless a single V already exceeds it)."""
    limit = max(max_lanes, _round_up(v, 128))
    candidates = []
    vp = _round_up(v, 8)
    while vp <= limit:
        max_tt = max(1, max_lanes // vp)
        for tt in range(1, max_tt + 1):
            lanes = tt * vp
            if lanes % 128 == 0 and (lanes <= max_lanes or tt == 1):
                candidates.append((vp, tt, lanes))
        vp += 8
    if not candidates:  # safety net; loop above always reaches a 128-multiple
        vp = _round_up(v, 128)
        candidates = [(vp, 1, vp)]

    def cost(c):
        vpad, tt, lanes = c
        t_pad = _round_up(t, tt)
        mxu_pushes = (t_pad // tt) * (-(-lanes // mxu)) ** 2  # graph-matmul passes
        macs = t_pad * tt * vpad * vpad                       # kron-inflated MACs
        return (mxu_pushes, macs, lanes)

    return min(candidates, key=cost)


def _pick_batch_block(n, k_sz, tb, lanes, itemsize, max_bn=4):
    """Batch elements per grid step; keep >=2 grid steps on the batch axis so
    megacore can split on n, and bound the unrolled block-diag build / scratch."""
    cands = [d for d in range(min(max_bn, n), 0, -1) if n % d == 0 and n // d >= 2]
    bn = cands[0] if cands else 1
    while bn > 1 and (bn * k_sz * tb > 256
                      or bn * k_sz * lanes * lanes * itemsize > 8 * 2**20):
        bn -= 1
        while bn > 1 and n % bn:
            bn -= 1
    return bn


def hetero_graph_conv_kernel(x_ref, a_ref, w_ref, o_ref, ablk_ref, *, compute_dtype):
    # x_ref:    (Bn, C_in+1, L)     activations; last channel == 1 carries the bias
    # a_ref:    (Bn, K, V_pad, L)   adjacency, zero-padded to V_pad, tiled along lanes
    # w_ref:    (K*C_out_p, C_in+1) TM-folded conv weight, folded bias in last column
    # o_ref:    (Bn, C_out_p, L)
    # ablk_ref: (Bn, K, L, L)       VMEM scratch: kron(I_Ttile, A[n,k]) built in-kernel
    j = pl.program_id(1)
    bn, k_sz, vp, lanes = a_ref.shape
    c_out_p = w_ref.shape[0] // k_sz
    tb = lanes // vp

    # Build the block-diagonal graph operand from the small adjacency only when
    # the batch block changes (the inner T-tile axis restarts at 0); it is then
    # reused across every T tile of this batch block.  Each row-slab store is
    # full lane width and sublane aligned (V_pad % 8 == 0): no masked stores.
    @pl.when(j == 0)
    def _build_block_diag():
        col = lax.broadcasted_iota(jnp.int32, (vp, lanes), 1)
        zero_slab = jnp.zeros((vp, lanes), dtype=compute_dtype)
        for tt in range(tb):
            in_blk = (col >= tt * vp) & (col < (tt + 1) * vp)
            for b in range(bn):
                for k in range(k_sz):
                    ablk_ref[b, k, tt * vp:(tt + 1) * vp, :] = jnp.where(
                        in_blk, a_ref[b, k], zero_slab)

    # Pointwise conv (TM + bias folded into the weight) interleaved per k with
    # the graph aggregation, so only one (C_out_p, L) intermediate is live.
    for b in range(bn):
        x_b = x_ref[b]                                            # (C_in+1, L)
        acc = None
        for k in range(k_sz):
            w_k = w_ref[k * c_out_p:(k + 1) * c_out_p, :]         # (C_out_p, C_in+1)
            z_k = jnp.dot(w_k, x_b, preferred_element_type=compute_dtype)
            p_k = jnp.dot(z_k, ablk_ref[b, k],
                          preferred_element_type=jnp.float32)     # (C_out_p, L)
            acc = p_k if acc is None else acc + p_k
        o_ref[b] = acc.astype(o_ref.dtype)                        # lane-dense store


def hetero_graph_conv(x, A, transform_matrix, w_conv, b_conv, kernel_size,
                      compute_dtype=jnp.bfloat16, out_dtype=None,
                      max_lanes=256, max_batch_block=4):
    """Forward pass of HeteroGraphConv (t_kernel_size=1).  Returns (out, A)."""
    n, c_in, t, v = x.shape
    k_sz = kernel_size
    c_out = w_conv.shape[0] // k_sz
    assert A.shape == (n, k_sz, v, v)
    assert transform_matrix.shape == (k_sz, c_out, c_out)
    out_dtype = x.dtype if out_dtype is None else out_dtype

    # ---- Fold the transform matrix into the 1x1-conv weight and bias (exact). --
    hi = lax.Precision.HIGHEST
    w3 = w_conv.reshape(k_sz, c_out, c_in)
    wf = jnp.einsum('kcx,kci->kxi', transform_matrix, w3, precision=hi)
    bf = jnp.einsum('kcx,kc->kx', transform_matrix, b_conv.reshape(k_sz, c_out),
                    precision=hi)

    # Pad C_out to a sublane multiple; append the folded bias as one extra input
    # channel (x gets a matching ones channel).
    c_out_p = _round_up(c_out, 8)
    if c_out_p != c_out:
        wf = jnp.pad(wf, ((0, 0), (0, c_out_p - c_out), (0, 0)))
        bf = jnp.pad(bf, ((0, 0), (0, c_out_p - c_out)))
    w_aug = jnp.concatenate([wf, bf[:, :, None]], axis=-1)        # (K, C_out_p, C_in+1)
    kcp = k_sz * c_out_p
    cin1 = c_in + 1
    w2 = w_aug.reshape(kcp, cin1).astype(compute_dtype)

    # ---- Tiling: fuse (T, V) into a lane-dense axis; pad V / T as needed. ------
    v_pad, t_tile, lanes = _choose_tiling(v, t, max_lanes=max_lanes,
                                          mxu=_mxu_width_guess())
    t_pad = _round_up(t, t_tile)
    nt = t_pad // t_tile
    l_total = t_pad * v_pad
    tb = lanes // v_pad

    ones = jnp.ones((n, 1, t, v), x.dtype)                        # bias channel
    x_aug = jnp.concatenate([x, ones], axis=1)                    # (N, C_in+1, T, V)
    x_aug = jnp.pad(x_aug, ((0, 0), (0, 0), (0, t_pad - t), (0, v_pad - v)))
    x2 = x_aug.reshape(n, cin1, l_total).astype(compute_dtype)

    # Tiny adjacency operand: zero-pad V -> V_pad and tile along lanes so the
    # kernel can assemble kron(I_Ttile, A) in VMEM with full-width stores.
    a_p = jnp.pad(A, ((0, 0), (0, 0), (0, v_pad - v), (0, v_pad - v)))
    a_lt = jnp.tile(a_p.astype(compute_dtype), (1, 1, 1, tb))     # (N, K, V_pad, L)

    # ---- Batch blocking + explicit VMEM budget (v7x has 64 MiB physical). ------
    isz_c = jnp.dtype(compute_dtype).itemsize
    isz_o = jnp.dtype(out_dtype).itemsize
    bn = _pick_batch_block(n, k_sz, tb, lanes, isz_c, max_batch_block)
    scratch_bytes = bn * k_sz * lanes * lanes * isz_c
    io_bytes = 2 * (bn * cin1 * lanes * isz_c + bn * k_sz * v_pad * lanes * isz_c
                    + kcp * cin1 * isz_c + bn * c_out_p * lanes * isz_o)
    vmem_limit = int(min(64 * 2**20,
                         max(16 * 2**20, scratch_bytes + io_bytes + 4 * 2**20)))

    kernel = functools.partial(hetero_graph_conv_kernel, compute_dtype=compute_dtype)
    out = pl.pallas_call(
        kernel,
        out_shape=jax.ShapeDtypeStruct((n, c_out_p, l_total), out_dtype),
        grid_spec=pltpu.PrefetchScalarGridSpec(
            num_scalar_prefetch=0,
            grid=(n // bn, nt),
            in_specs=[
                pl.BlockSpec((bn, cin1, lanes), lambda i, j: (i, 0, j)),
                pl.BlockSpec((bn, k_sz, v_pad, lanes), lambda i, j: (i, 0, 0, 0)),
                pl.BlockSpec((kcp, cin1), lambda i, j: (0, 0)),
            ],
            out_specs=pl.BlockSpec((bn, c_out_p, lanes), lambda i, j: (i, 0, j)),
            scratch_shapes=[pltpu.VMEM((bn, k_sz, lanes, lanes), compute_dtype)],
        ),
        compiler_params=pltpu.CompilerParams(
            dimension_semantics=("parallel", "arbitrary"),
            vmem_limit_bytes=vmem_limit),
    )(x2, a_lt, w2)

    out = out.reshape(n, c_out_p, t_pad, v_pad)[:, :c_out, :t, :v]
    return out, A


def reference_forward(x, A, transform_matrix, w_conv, b_conv, kernel_size):
    """Pure-JAX replica of the PyTorch forward (t_kernel_size=1)."""
    hi = lax.Precision.HIGHEST
    y = jnp.einsum('oc,nctv->notv', w_conv, x, precision=hi) \
        + b_conv[None, :, None, None]
    n, kc, t, v = y.shape
    c = kc // kernel_size
    y = y.reshape(n, kernel_size, c, t, v)
    x_transformed = jnp.einsum('nkctv,kcx->nkxtv', y, transform_matrix, precision=hi)
    x_convoluted = jnp.einsum('nkxtv,nkvw->nxtw', x_transformed, A, precision=hi)
    return x_convoluted, A


def _make_inputs(key, n, c_in, c_out, k_sz, t, v):
    k1, k2, k3, k4, k5 = jax.random.split(key, 5)
    x = jax.random.normal(k1, (n, c_in, t, v), dtype=jnp.float32)
    A = jax.random.normal(k2, (n, k_sz, v, v), dtype=jnp.float32)
    tm = jax.random.normal(k3, (k_sz, c_out, c_out), dtype=jnp.float32)
    bound = 1.0 / (c_in ** 0.5)
    w_conv = jax.random.uniform(k4, (k_sz * c_out, c_in), jnp.float32, -bound, bound)
    b_conv = jax.random.uniform(k5, (k_sz * c_out,), jnp.float32, -bound, bound)
    return x, A, tm, w_conv, b_conv


if __name__ == "__main__":
    key1, key2 = jax.random.split(jax.random.PRNGKey(0))

    # ---- Case 1: friendly shapes (V multiple of 8, T tile friendly). ----------
    N, C_IN, C_OUT, K, T, V = 2, 4, 8, 3, 8, 16
    x, A, tm, w_conv, b_conv = _make_inputs(key1, N, C_IN, C_OUT, K, T, V)
    ref, _ = reference_forward(x, A, tm, w_conv, b_conv, K)
    scale = jnp.max(jnp.abs(ref))

    out_f32, A_out = hetero_graph_conv(x, A, tm, w_conv, b_conv, K,
                                       compute_dtype=jnp.float32)
    out_f32 = jax.block_until_ready(out_f32)
    assert out_f32.shape == (N, C_OUT, T, V) and out_f32.dtype == jnp.float32
    assert jnp.max(jnp.abs(out_f32 - ref)) <= 5e-3 * scale + 1e-4, \
        "f32 path mismatch vs reference"
    assert jnp.array_equal(A_out, A)

    out_bf16, _ = hetero_graph_conv(x, A, tm, w_conv, b_conv, K,
                                    compute_dtype=jnp.bfloat16,
                                    out_dtype=jnp.bfloat16)
    out_bf16 = jax.block_until_ready(out_bf16)
    assert out_bf16.shape == (N, C_OUT, T, V) and out_bf16.dtype == jnp.bfloat16
    assert jnp.max(jnp.abs(out_bf16.astype(jnp.float32) - ref)) <= 3e-2 * scale, \
        "bf16 path mismatch vs reference"

    # ---- Case 2: awkward shapes (V=25 skeleton, T not a multiple of the tile) --
    # exercises the V/T zero-padding path that replaced the old nt=1 fallback.
    N2, C_IN2, C_OUT2, K2, T2, V2 = 2, 3, 16, 3, 12, 25
    xb, Ab, tmb, wcb, bcb = _make_inputs(key2, N2, C_IN2, C_OUT2, K2, T2, V2)
    ref2, _ = reference_forward(xb, Ab, tmb, wcb, bcb, K2)
    scale2 = jnp.max(jnp.abs(ref2))
    out2, _ = hetero_graph_conv(xb, Ab, tmb, wcb, bcb, K2,
                                compute_dtype=jnp.float32)
    out2 = jax.block_until_ready(out2)
    assert out2.shape == (N2, C_OUT2, T2, V2)
    assert jnp.max(jnp.abs(out2 - ref2)) <= 5e-3 * scale2 + 1e-4, \
        "padded-shape (V=25) path mismatch vs reference"

    print("KERNEL_OK")
</pallas_src>

<mosaic_0001>
module attributes {stable_mosaic.version = 11 : i64} {
  func.func @hetero_graph_conv_kernel(%arg0: i32, %arg1: i32, %arg2: memref<1x5x128xf32, #tpu.memory_space<vmem>>, %arg3: memref<1x3x16x128xf32, #tpu.memory_space<vmem>>, %arg4: memref<24x5xf32, #tpu.memory_space<vmem>>, %arg5: memref<1x8x128xf32, #tpu.memory_space<vmem>>, %arg6: memref<1x3x128x128xf32, #tpu.memory_space<vmem>>) attributes {dimension_semantics = [#tpu.dimension_semantics<parallel>, #tpu.dimension_semantics<arbitrary>], iteration_bounds = array<i64: 2, 1>, scalar_prefetch = 0 : i64, scratch_operands = 1 : i64, tpu.core_type = #tpu.core_type<tc>, window_params = [{transform_indices = @transform_0, window_bounds = array<i64: 1, 5, 128>}, {transform_indices = @transform_1, window_bounds = array<i64: 1, 3, 16, 128>}, {pipeline_mode = #tpu.pipeline_mode<synchronous>, transform_indices = @transform_2, window_bounds = array<i64: 24, 5>}, {transform_indices = @transform_3, window_bounds = array<i64: 1, 8, 128>}]} {
    %c0_i32 = arith.constant 0 : i32
    %0 = arith.cmpi eq, %arg1, %c0_i32 : i32
    %1 = arith.extui %0 : i1 to i32
    %c0_i32_0 = arith.constant 0 : i32
    %2 = arith.cmpi ne, %1, %c0_i32_0 : i32
    scf.if %2 {
      %25 = tpu.iota {dimensions = array<i32: 1>} : vector<16x128xi32>
      %cst_25 = arith.constant 0.000000e+00 : f32
      %26 = vector.broadcast %cst_25 : f32 to vector<16x128xf32>
      %c0_i32_26 = arith.constant 0 : i32
      %27 = vector.broadcast %c0_i32_26 : i32 to vector<16x128xi32>
      %28 = arith.cmpi sge, %25, %27 : vector<16x128xi32>
      %c16_i32 = arith.constant 16 : i32
      %29 = vector.broadcast %c16_i32 : i32 to vector<16x128xi32>
      %30 = arith.cmpi slt, %25, %29 : vector<16x128xi32>
      %31 = arith.andi %28, %30 : vector<16x128xi1>
      %c0_27 = arith.constant 0 : index
      %c0_28 = arith.constant 0 : index
      %c0_29 = arith.constant 0 : index
      %c0_30 = arith.constant 0 : index
      %32 = vector.load %arg3[%c0_27, %c0_28, %c0_29, %c0_30] : memref<1x3x16x128xf32, #tpu.memory_space<vmem>>, vector<1x1x16x128xf32>
      %33 = vector.shape_cast %32 : vector<1x1x16x128xf32> to vector<16x128xf32>
      %34 = arith.select %31, %33, %26 : vector<16x128xi1>, vector<16x128xf32>
      %c0_31 = arith.constant 0 : index
      %c0_32 = arith.constant 0 : index
      %c0_33 = arith.constant 0 : index
      %c0_34 = arith.constant 0 : index
      %35 = vector.load %arg6[%c0_31, %c0_32, %c0_33, %c0_34] : memref<1x3x128x128xf32, #tpu.memory_space<vmem>>, vector<1x1x16x128xf32>
      %36 = vector.shape_cast %35 : vector<1x1x16x128xf32> to vector<16x128xf32>
      %37 = vector.shape_cast %34 : vector<16x128xf32> to vector<1x1x16x128xf32>
      tpu.vector_store %arg6[%c0_31, %c0_32, %c0_33, %c0_34], %37 {strides = array<i32>} : memref<1x3x128x128xf32, #tpu.memory_space<vmem>>, vector<1x1x16x128xf32>,
      %c0_35 = arith.constant 0 : index
      %c1_36 = arith.constant 1 : index
      %c0_37 = arith.constant 0 : index
      %c0_38 = arith.constant 0 : index
      %38 = vector.load %arg3[%c0_35, %c1_36, %c0_37, %c0_38] : memref<1x3x16x128xf32, #tpu.memory_space<vmem>>, vector<1x1x16x128xf32>
      %39 = vector.shape_cast %38 : vector<1x1x16x128xf32> to vector<16x128xf32>
      %40 = arith.select %31, %39, %26 : vector<16x128xi1>, vector<16x128xf32>
      %c0_39 = arith.constant 0 : index
      %c1_40 = arith.constant 1 : index
      %c0_41 = arith.constant 0 : index
      %c0_42 = arith.constant 0 : index
      %41 = vector.load %arg6[%c0_39, %c1_40, %c0_41, %c0_42] : memref<1x3x128x128xf32, #tpu.memory_space<vmem>>, vector<1x1x16x128xf32>
      %42 = vector.shape_cast %41 : vector<1x1x16x128xf32> to vector<16x128xf32>
      %43 = vector.shape_cast %40 : vector<16x128xf32> to vector<1x1x16x128xf32>
      tpu.vector_store %arg6[%c0_39, %c1_40, %c0_41, %c0_42], %43 {strides = array<i32>} : memref<1x3x128x128xf32, #tpu.memory_space<vmem>>, vector<1x1x16x128xf32>,
      %c0_43 = arith.constant 0 : index
      %c2_44 = arith.constant 2 : index
      %c0_45 = arith.constant 0 : index
      %c0_46 = arith.constant 0 : index
      %44 = vector.load %arg3[%c0_43, %c2_44, %c0_45, %c0_46] : memref<1x3x16x128xf32, #tpu.memory_space<vmem>>, vector<1x1x16x128xf32>
      %45 = vector.shape_cast %44 : vector<1x1x16x128xf32> to vector<16x128xf32>
      %46 = arith.select %31, %45, %26 : vector<16x128xi1>, vector<16x128xf32>
      %c0_47 = arith.constant 0 : index
      %c2_48 = arith.constant 2 : index
      %c0_49 = arith.constant 0 : index
      %c0_50 = arith.constant 0 : index
      %47 = vector.load %arg6[%c0_47, %c2_48, %c0_49, %c0_50] : memref<1x3x128x128xf32, #tpu.memory_space<vmem>>, vector<1x1x16x128xf32>
      %48 = vector.shape_cast %47 : vector<1x1x16x128xf32> to vector<16x128xf32>
      %49 = vector.shape_cast %46 : vector<16x128xf32> to vector<1x1x16x128xf32>
      tpu.vector_store %arg6[%c0_47, %c2_48, %c0_49, %c0_50], %49 {strides = array<i32>} : memref<1x3x128x128xf32, #tpu.memory_space<vmem>>, vector<1x1x16x128xf32>,
      %c16_i32_51 = arith.constant 16 : i32
      %50 = vector.broadcast %c16_i32_51 : i32 to vector<16x128xi32>
      %51 = arith.cmpi sge, %25, %50 : vector<16x128xi32>
      %c32_i32 = arith.constant 32 : i32
      %52 = vector.broadcast %c32_i32 : i32 to vector<16x128xi32>
      %53 = arith.cmpi slt, %25, %52 : vector<16x128xi32>
      %54 = arith.andi %51, %53 : vector<16x128xi1>
      %c0_52 = arith.constant 0 : index
      %c0_53 = arith.constant 0 : index
      %c0_54 = arith.constant 0 : index
      %c0_55 = arith.constant 0 : index
      %55 = vector.load %arg3[%c0_52, %c0_53, %c0_54, %c0_55] : memref<1x3x16x128xf32, #tpu.memory_space<vmem>>, vector<1x1x16x128xf32>
      %56 = vector.shape_cast %55 : vector<1x1x16x128xf32> to vector<16x128xf32>
      %57 = arith.select %54, %56, %26 : vector<16x128xi1>, vector<16x128xf32>
      %c0_56 = arith.constant 0 : index
      %c0_57 = arith.constant 0 : index
      %c16_58 = arith.constant 16 : index
      %c0_59 = arith.constant 0 : index
      %58 = vector.load %arg6[%c0_56, %c0_57, %c16_58, %c0_59] : memref<1x3x128x128xf32, #tpu.memory_space<vmem>>, vector<1x1x16x128xf32>
      %59 = vector.shape_cast %58 : vector<1x1x16x128xf32> to vector<16x128xf32>
      %60 = vector.shape_cast %57 : vector<16x128xf32> to vector<1x1x16x128xf32>
      tpu.vector_store %arg6[%c0_56, %c0_57, %c16_58, %c0_59], %60 {strides = array<i32>} : memref<1x3x128x128xf32, #tpu.memory_space<vmem>>, vector<1x1x16x128xf32>,
      %c0_60 = arith.constant 0 : index
      %c1_61 = arith.constant 1 : index
      %c0_62 = arith.constant 0 : index
      %c0_63 = arith.constant 0 : index
      %61 = vector.load %arg3[%c0_60, %c1_61, %c0_62, %c0_63] : memref<1x3x16x128xf32, #tpu.memory_space<vmem>>, vector<1x1x16x128xf32>
      %62 = vector.shape_cast %61 : vector<1x1x16x128xf32> to vector<16x128xf32>
      %63 = arith.select %54, %62, %26 : vector<16x128xi1>, vector<16x128xf32>
      %c0_64 = arith.constant 0 : index
      %c1_65 = arith.constant 1 : index
      %c16_66 = arith.constant 16 : index
      %c0_67 = arith.constant 0 : index
      %64 = vector.load %arg6[%c0_64, %c1_65, %c16_66, %c0_67] : memref<1x3x128x128xf32, #tpu.memory_space<vmem>>, vector<1x1x16x128xf32>
      %65 = vector.shape_cast %64 : vector<1x1x16x128xf32> to vector<16x128xf32>
      %66 = vector.shape_cast %63 : vector<16x128xf32> to vector<1x1x16x128xf32>
      tpu.vector_store %arg6[%c0_64, %c1_65, %c16_66, %c0_67], %66 {strides = array<i32>} : memref<1x3x128x128xf32, #tpu.memory_space<vmem>>, vector<1x1x16x128xf32>,
      %c0_68 = arith.constant 0 : index
      %c2_69 = arith.constant 2 : index
      %c0_70 = arith.constant 0 : index
      %c0_71 = arith.constant 0 : index
      %67 = vector.load %arg3[%c0_68, %c2_69, %c0_70, %c0_71] : memref<1x3x16x128xf32, #tpu.memory_space<vmem>>, vector<1x1x16x128xf32>
      %68 = vector.shape_cast %67 : vector<1x1x16x128xf32> to vector<16x128xf32>
      %69 = arith.select %54, %68, %26 : vector<16x128xi1>, vector<16x128xf32>
      %c0_72 = arith.constant 0 : index
      %c2_73 = arith.constant 2 : index
      %c16_74 = arith.constant 16 : index
      %c0_75 = arith.constant 0 : index
      %70 = vector.load %arg6[%c0_72, %c2_73, %c16_74, %c0_75] : memref<1x3x128x128xf32, #tpu.memory_space<vmem>>, vector<1x1x16x128xf32>
      %71 = vector.shape_cast %70 : vector<1x1x16x128xf32> to vector<16x128xf32>
      %72 = vector.shape_cast %69 : vector<16x128xf32> to vector<1x1x16x128xf32>
      tpu.vector_store %arg6[%c0_72, %c2_73, %c16_74, %c0_75], %72 {strides = array<i32>} : memref<1x3x128x128xf32, #tpu.memory_space<vmem>>, vector<1x1x16x128xf32>,
      %c32_i32_76 = arith.constant 32 : i32
      %73 = vector.broadcast %c32_i32_76 : i32 to vector<16x128xi32>
      %74 = arith.cmpi sge, %25, %73 : vector<16x128xi32>
      %c48_i32 = arith.constant 48 : i32
      %75 = vector.broadcast %c48_i32 : i32 to vector<16x128xi32>
      %76 = arith.cmpi slt, %25, %75 : vector<16x128xi32>
      %77 = arith.andi %74, %76 : vector<16x128xi1>
      %c0_77 = arith.constant 0 : index
      %c0_78 = arith.constant 0 : index
      %c0_79 = arith.constant 0 : index
      %c0_80 = arith.constant 0 : index
      %78 = vector.load %arg3[%c0_77, %c0_78, %c0_79, %c0_80] : memref<1x3x16x128xf32, #tpu.memory_space<vmem>>, vector<1x1x16x128xf32>
      %79 = vector.shape_cast %78 : vector<1x1x16x128xf32> to vector<16x128xf32>
      %80 = arith.select %77, %79, %26 : vector<16x128xi1>, vector<16x128xf32>
      %c0_81 = arith.constant 0 : index
      %c0_82 = arith.constant 0 : index
      %c32 = arith.constant 32 : index
      %c0_83 = arith.constant 0 : index
      %81 = vector.load %arg6[%c0_81, %c0_82, %c32, %c0_83] : memref<1x3x128x128xf32, #tpu.memory_space<vmem>>, vector<1x1x16x128xf32>
      %82 = vector.shape_cast %81 : vector<1x1x16x128xf32> to vector<16x128xf32>
      %83 = vector.shape_cast %80 : vector<16x128xf32> to vector<1x1x16x128xf32>
      tpu.vector_store %arg6[%c0_81, %c0_82, %c32, %c0_83], %83 {strides = array<i32>} : memref<1x3x128x128xf32, #tpu.memory_space<vmem>>, vector<1x1x16x128xf32>,
      %c0_84 = arith.constant 0 : index
      %c1_85 = arith.constant 1 : index
      %c0_86 = arith.constant 0 : index
      %c0_87 = arith.constant 0 : index
      %84 = vector.load %arg3[%c0_84, %c1_85, %c0_86, %c0_87] : memref<1x3x16x128xf32, #tpu.memory_space<vmem>>, vector<1x1x16x128xf32>
      %85 = vector.shape_cast %84 : vector<1x1x16x128xf32> to vector<16x128xf32>
      %86 = arith.select %77, %85, %26 : vector<16x128xi1>, vector<16x128xf32>
      %c0_88 = arith.constant 0 : index
      %c1_89 = arith.constant 1 : index
      %c32_90 = arith.constant 32 : index
      %c0_91 = arith.constant 0 : index
      %87 = vector.load %arg6[%c0_88, %c1_89, %c32_90, %c0_91] : memref<1x3x128x128xf32, #tpu.memory_space<vmem>>, vector<1x1x16x128xf32>
      %88 = vector.shape_cast %87 : vector<1x1x16x128xf32> to vector<16x128xf32>
      %89 = vector.shape_cast %86 : vector<16x128xf32> to vector<1x1x16x128xf32>
      tpu.vector_store %arg6[%c0_88, %c1_89, %c32_90, %c0_91], %89 {strides = array<i32>} : memref<1x3x128x128xf32, #tpu.memory_space<vmem>>, vector<1x1x16x128xf32>,
      %c0_92 = arith.constant 0 : index
      %c2_93 = arith.constant 2 : index
      %c0_94 = arith.constant 0 : index
      %c0_95 = arith.constant 0 : index
      %90 = vector.load %arg3[%c0_92, %c2_93, %c0_94, %c0_95] : memref<1x3x16x128xf32, #tpu.memory_space<vmem>>, vector<1x1x16x128xf32>
      %91 = vector.shape_cast %90 : vector<1x1x16x128xf32> to vector<16x128xf32>
      %92 = arith.select %77, %91, %26 : vector<16x128xi1>, vector<16x128xf32>
      %c0_96 = arith.constant 0 : index
      %c2_97 = arith.constant 2 : index
      %c32_98 = arith.constant 32 : index
      %c0_99 = arith.constant 0 : index
      %93 = vector.load %arg6[%c0_96, %c2_97, %c32_98, %c0_99] : memref<1x3x128x128xf32, #tpu.memory_space<vmem>>, vector<1x1x16x128xf32>
      %94 = vector.shape_cast %93 : vector<1x1x16x128xf32> to vector<16x128xf32>
      %95 = vector.shape_cast %92 : vector<16x128xf32> to vector<1x1x16x128xf32>
      tpu.vector_store %arg6[%c0_96, %c2_97, %c32_98, %c0_99], %95 {strides = array<i32>} : memref<1x3x128x128xf32, #tpu.memory_space<vmem>>, vector<1x1x16x128xf32>,
      %c48_i32_100 = arith.constant 48 : i32
      %96 = vector.broadcast %c48_i32_100 : i32 to vector<16x128xi32>
      %97 = arith.cmpi sge, %25, %96 : vector<16x128xi32>
      %c64_i32 = arith.constant 64 : i32
      %98 = vector.broadcast %c64_i32 : i32 to vector<16x128xi32>
      %99 = arith.cmpi slt, %25, %98 : vector<16x128xi32>
      %100 = arith.andi %97, %99 : vector<16x128xi1>
      %c0_101 = arith.constant 0 : index
      %c0_102 = arith.constant 0 : index
      %c0_103 = arith.constant 0 : index
      %c0_104 = arith.constant 0 : index
      %101 = vector.load %arg3[%c0_101, %c0_102, %c0_103, %c0_104] : memref<1x3x16x128xf32, #tpu.memory_space<vmem>>, vector<1x1x16x128xf32>
      %102 = vector.shape_cast %101 : vector<1x1x16x128xf32> to vector<16x128xf32>
      %103 = arith.select %100, %102, %26 : vector<16x128xi1>, vector<16x128xf32>
      %c0_105 = arith.constant 0 : index
      %c0_106 = arith.constant 0 : index
      %c48 = arith.constant 48 : index
      %c0_107 = arith.constant 0 : index
      %104 = vector.load %arg6[%c0_105, %c0_106, %c48, %c0_107] : memref<1x3x128x128xf32, #tpu.memory_space<vmem>>, vector<1x1x16x128xf32>
      %105 = vector.shape_cast %104 : vector<1x1x16x128xf32> to vector<16x128xf32>
      %106 = vector.shape_cast %103 : vector<16x128xf32> to vector<1x1x16x128xf32>
      tpu.vector_store %arg6[%c0_105, %c0_106, %c48, %c0_107], %106 {strides = array<i32>} : memref<1x3x128x128xf32, #tpu.memory_space<vmem>>, vector<1x1x16x128xf32>,
      %c0_108 = arith.constant 0 : index
      %c1_109 = arith.constant 1 : index
      %c0_110 = arith.constant 0 : index
      %c0_111 = arith.constant 0 : index
      %107 = vector.load %arg3[%c0_108, %c1_109, %c0_110, %c0_111] : memref<1x3x16x128xf32, #tpu.memory_space<vmem>>, vector<1x1x16x128xf32>
      %108 = vector.shape_cast %107 : vector<1x1x16x128xf32> to vector<16x128xf32>
      %109 = arith.select %100, %108, %26 : vector<16x128xi1>, vector<16x128xf32>
      %c0_112 = arith.constant 0 : index
      %c1_113 = arith.constant 1 : index
      %c48_114 = arith.constant 48 : index
      %c0_115 = arith.constant 0 : index
      %110 = vector.load %arg6[%c0_112, %c1_113, %c48_114, %c0_115] : memref<1x3x128x128xf32, #tpu.memory_space<vmem>>, vector<1x1x16x128xf32>
      %111 = vector.shape_cast %110 : vector<1x1x16x128xf32> to vector<16x128xf32>
      %112 = vector.shape_cast %109 : vector<16x128xf32> to vector<1x1x16x128xf32>
      tpu.vector_store %arg6[%c0_112, %c1_113, %c48_114, %c0_115], %112 {strides = array<i32>} : memref<1x3x128x128xf32, #tpu.memory_space<vmem>>, vector<1x1x16x128xf32>,
      %c0_116 = arith.constant 0 : index
      %c2_117 = arith.constant 2 : index
      %c0_118 = arith.constant 0 : index
      %c0_119 = arith.constant 0 : index
      %113 = vector.load %arg3[%c0_116, %c2_117, %c0_118, %c0_119] : memref<1x3x16x128xf32, #tpu.memory_space<vmem>>, vector<1x1x16x128xf32>
      %114 = vector.shape_cast %113 : vector<1x1x16x128xf32> to vector<16x128xf32>
      %115 = arith.select %100, %114, %26 : vector<16x128xi1>, vector<16x128xf32>
      %c0_120 = arith.constant 0 : index
      %c2_121 = arith.constant 2 : index
      %c48_122 = arith.constant 48 : index
      %c0_123 = arith.constant 0 : index
      %116 = vector.load %arg6[%c0_120, %c2_121, %c48_122, %c0_123] : memref<1x3x128x128xf32, #tpu.memory_space<vmem>>, vector<1x1x16x128xf32>
      %117 = vector.shape_cast %116 : vector<1x1x16x128xf32> to vector<16x128xf32>
      %118 = vector.shape_cast %115 : vector<16x128xf32> to vector<1x1x16x128xf32>
      tpu.vector_store %arg6[%c0_120, %c2_121, %c48_122, %c0_123], %118 {strides = array<i32>} : memref<1x3x128x128xf32, #tpu.memory_space<vmem>>, vector<1x1x16x128xf32>,
      %c64_i32_124 = arith.constant 64 : i32
      %119 = vector.broadcast %c64_i32_124 : i32 to vector<16x128xi32>
      %120 = arith.cmpi sge, %25, %119 : vector<16x128xi32>
      %c80_i32 = arith.constant 80 : i32
      %121 = vector.broadcast %c80_i32 : i32 to vector<16x128xi32>
      %122 = arith.cmpi slt, %25, %121 : vector<16x128xi32>
      %123 = arith.andi %120, %122 : vector<16x128xi1>
      %c0_125 = arith.constant 0 : index
      %c0_126 = arith.constant 0 : index
      %c0_127 = arith.constant 0 : index
      %c0_128 = arith.constant 0 : index
      %124 = vector.load %arg3[%c0_125, %c0_126, %c0_127, %c0_128] : memref<1x3x16x128xf32, #tpu.memory_space<vmem>>, vector<1x1x16x128xf32>
      %125 = vector.shape_cast %124 : vector<1x1x16x128xf32> to vector<16x128xf32>
      %126 = arith.select %123, %125, %26 : vector<16x128xi1>, vector<16x128xf32>
      %c0_129 = arith.constant 0 : index
      %c0_130 = arith.constant 0 : index
      %c64 = arith.constant 64 : index
      %c0_131 = arith.constant 0 : index
      %127 = vector.load %arg6[%c0_129, %c0_130, %c64, %c0_131] : memref<1x3x128x128xf32, #tpu.memory_space<vmem>>, vector<1x1x16x128xf32>
      %128 = vector.shape_cast %127 : vector<1x1x16x128xf32> to vector<16x128xf32>
      %129 = vector.shape_cast %126 : vector<16x128xf32> to vector<1x1x16x128xf32>
      tpu.vector_store %arg6[%c0_129, %c0_130, %c64, %c0_131], %129 {strides = array<i32>} : memref<1x3x128x128xf32, #tpu.memory_space<vmem>>, vector<1x1x16x128xf32>,
      %c0_132 = arith.constant 0 : index
      %c1_133 = arith.constant 1 : index
      %c0_134 = arith.constant 0 : index
      %c0_135 = arith.constant 0 : index
      %130 = vector.load %arg3[%c0_132, %c1_133, %c0_134, %c0_135] : memref<1x3x16x128xf32, #tpu.memory_space<vmem>>, vector<1x1x16x128xf32>
      %131 = vector.shape_cast %130 : vector<1x1x16x128xf32> to vector<16x128xf32>
      %132 = arith.select %123, %131, %26 : vector<16x128xi1>, vector<16x128xf32>
      %c0_136 = arith.constant 0 : index
      %c1_137 = arith.constant 1 : index
      %c64_138 = arith.constant 64 : index
      %c0_139 = arith.constant 0 : index
      %133 = vector.load %arg6[%c0_136, %c1_137, %c64_138, %c0_139] : memref<1x3x128x128xf32, #tpu.memory_space<vmem>>, vector<1x1x16x128xf32>
      %134 = vector.shape_cast %133 : vector<1x1x16x128xf32> to vector<16x128xf32>
      %135 = vector.shape_cast %132 : vector<16x128xf32> to vector<1x1x16x128xf32>
      tpu.vector_store %arg6[%c0_136, %c1_137, %c64_138, %c0_139], %135 {strides = array<i32>} : memref<1x3x128x128xf32, #tpu.memory_space<vmem>>, vector<1x1x16x128xf32>,
      %c0_140 = arith.constant 0 : index
      %c2_141 = arith.constant 2 : index
      %c0_142 = arith.constant 0 : index
      %c0_143 = arith.constant 0 : index
      %136 = vector.load %arg3[%c0_140, %c2_141, %c0_142, %c0_143] : memref<1x3x16x128xf32, #tpu.memory_space<vmem>>, vector<1x1x16x128xf32>
      %137 = vector.shape_cast %136 : vector<1x1x16x128xf32> to vector<16x128xf32>
      %138 = arith.select %123, %137, %26 : vector<16x128xi1>, vector<16x128xf32>
      %c0_144 = arith.constant 0 : index
      %c2_145 = arith.constant 2 : index
      %c64_146 = arith.constant 64 : index
      %c0_147 = arith.constant 0 : index
      %139 = vector.load %arg6[%c0_144, %c2_145, %c64_146, %c0_147] : memref<1x3x128x128xf32, #tpu.memory_space<vmem>>, vector<1x1x16x128xf32>
      %140 = vector.shape_cast %139 : vector<1x1x16x128xf32> to vector<16x128xf32>
      %141 = vector.shape_cast %138 : vector<16x128xf32> to vector<1x1x16x128xf32>
      tpu.vector_store %arg6[%c0_144, %c2_145, %c64_146, %c0_147], %141 {strides = array<i32>} : memref<1x3x128x128xf32, #tpu.memory_space<vmem>>, vector<1x1x16x128xf32>,
      %c80_i32_148 = arith.constant 80 : i32
      %142 = vector.broadcast %c80_i32_148 : i32 to vector<16x128xi32>
      %143 = arith.cmpi sge, %25, %142 : vector<16x128xi32>
      %c96_i32 = arith.constant 96 : i32
      %144 = vector.broadcast %c96_i32 : i32 to vector<16x128xi32>
      %145 = arith.cmpi slt, %25, %144 : vector<16x128xi32>
      %146 = arith.andi %143, %145 : vector<16x128xi1>
      %c0_149 = arith.constant 0 : index
      %c0_150 = arith.constant 0 : index
      %c0_151 = arith.constant 0 : index
      %c0_152 = arith.constant 0 : index
      %147 = vector.load %arg3[%c0_149, %c0_150, %c0_151, %c0_152] : memref<1x3x16x128xf32, #tpu.memory_space<vmem>>, vector<1x1x16x128xf32>
      %148 = vector.shape_cast %147 : vector<1x1x16x128xf32> to vector<16x128xf32>
      %149 = arith.select %146, %148, %26 : vector<16x128xi1>, vector<16x128xf32>
      %c0_153 = arith.constant 0 : index
      %c0_154 = arith.constant 0 : index
      %c80 = arith.constant 80 : index
      %c0_155 = arith.constant 0 : index
      %150 = vector.load %arg6[%c0_153, %c0_154, %c80, %c0_155] : memref<1x3x128x128xf32, #tpu.memory_space<vmem>>, vector<1x1x16x128xf32>
      %151 = vector.shape_cast %150 : vector<1x1x16x128xf32> to vector<16x128xf32>
      %152 = vector.shape_cast %149 : vector<16x128xf32> to vector<1x1x16x128xf32>
      tpu.vector_store %arg6[%c0_153, %c0_154, %c80, %c0_155], %152 {strides = array<i32>} : memref<1x3x128x128xf32, #tpu.memory_space<vmem>>, vector<1x1x16x128xf32>,
      %c0_156 = arith.constant 0 : index
      %c1_157 = arith.constant 1 : index
      %c0_158 = arith.constant 0 : index
      %c0_159 = arith.constant 0 : index
      %153 = vector.load %arg3[%c0_156, %c1_157, %c0_158, %c0_159] : memref<1x3x16x128xf32, #tpu.memory_space<vmem>>, vector<1x1x16x128xf32>
      %154 = vector.shape_cast %153 : vector<1x1x16x128xf32> to vector<16x128xf32>
      %155 = arith.select %146, %154, %26 : vector<16x128xi1>, vector<16x128xf32>
      %c0_160 = arith.constant 0 : index
      %c1_161 = arith.constant 1 : index
      %c80_162 = arith.constant 80 : index
      %c0_163 = arith.constant 0 : index
      %156 = vector.load %arg6[%c0_160, %c1_161, %c80_162, %c0_163] : memref<1x3x128x128xf32, #tpu.memory_space<vmem>>, vector<1x1x16x128xf32>
      %157 = vector.shape_cast %156 : vector<1x1x16x128xf32> to vector<16x128xf32>
      %158 = vector.shape_cast %155 : vector<16x128xf32> to vector<1x1x16x128xf32>
      tpu.vector_store %arg6[%c0_160, %c1_161, %c80_162, %c0_163], %158 {strides = array<i32>} : memref<1x3x128x128xf32, #tpu.memory_space<vmem>>, vector<1x1x16x128xf32>,
      %c0_164 = arith.constant 0 : index
      %c2_165 = arith.constant 2 : index
      %c0_166 = arith.constant 0 : index
      %c0_167 = arith.constant 0 : index
      %159 = vector.load %arg3[%c0_164, %c2_165, %c0_166, %c0_167] : memref<1x3x16x128xf32, #tpu.memory_space<vmem>>, vector<1x1x16x128xf32>
      %160 = vector.shape_cast %159 : vector<1x1x16x128xf32> to vector<16x128xf32>
      %161 = arith.select %146, %160, %26 : vector<16x128xi1>, vector<16x128xf32>
      %c0_168 = arith.constant 0 : index
      %c2_169 = arith.constant 2 : index
      %c80_170 = arith.constant 80 : index
      %c0_171 = arith.constant 0 : index
      %162 = vector.load %arg6[%c0_168, %c2_169, %c80_170, %c0_171] : memref<1x3x128x128xf32, #tpu.memory_space<vmem>>, vector<1x1x16x128xf32>
      %163 = vector.shape_cast %162 : vector<1x1x16x128xf32> to vector<16x128xf32>
      %164 = vector.shape_cast %161 : vector<16x128xf32> to vector<1x1x16x128xf32>
      tpu.vector_store %arg6[%c0_168, %c2_169, %c80_170, %c0_171], %164 {strides = array<i32>} : memref<1x3x128x128xf32, #tpu.memory_space<vmem>>, vector<1x1x16x128xf32>,
      %c96_i32_172 = arith.constant 96 : i32
      %165 = vector.broadcast %c96_i32_172 : i32 to vector<16x128xi32>
      %166 = arith.cmpi sge, %25, %165 : vector<16x128xi32>
      %c112_i32 = arith.constant 112 : i32
      %167 = vector.broadcast %c112_i32 : i32 to vector<16x128xi32>
      %168 = arith.cmpi slt, %25, %167 : vector<16x128xi32>
      %169 = arith.andi %166, %168 : vector<16x128xi1>
      %c0_173 = arith.constant 0 : index
      %c0_174 = arith.constant 0 : index
      %c0_175 = arith.constant 0 : index
      %c0_176 = arith.constant 0 : index
      %170 = vector.load %arg3[%c0_173, %c0_174, %c0_175, %c0_176] : memref<1x3x16x128xf32, #tpu.memory_space<vmem>>, vector<1x1x16x128xf32>
      %171 = vector.shape_cast %170 : vector<1x1x16x128xf32> to vector<16x128xf32>
      %172 = arith.select %169, %171, %26 : vector<16x128xi1>, vector<16x128xf32>
      %c0_177 = arith.constant 0 : index
      %c0_178 = arith.constant 0 : index
      %c96 = arith.constant 96 : index
      %c0_179 = arith.constant 0 : index
      %173 = vector.load %arg6[%c0_177, %c0_178, %c96, %c0_179] : memref<1x3x128x128xf32, #tpu.memory_space<vmem>>, vector<1x1x16x128xf32>
      %174 = vector.shape_cast %173 : vector<1x1x16x128xf32> to vector<16x128xf32>
      %175 = vector.shape_cast %172 : vector<16x128xf32> to vector<1x1x16x128xf32>
      tpu.vector_store %arg6[%c0_177, %c0_178, %c96, %c0_179], %175 {strides = array<i32>} : memref<1x3x128x128xf32, #tpu.memory_space<vmem>>, vector<1x1x16x128xf32>,
      %c0_180 = arith.constant 0 : index
      %c1_181 = arith.constant 1 : index
      %c0_182 = arith.constant 0 : index
      %c0_183 = arith.constant 0 : index
      %176 = vector.load %arg3[%c0_180, %c1_181, %c0_182, %c0_183] : memref<1x3x16x128xf32, #tpu.memory_space<vmem>>, vector<1x1x16x128xf32>
      %177 = vector.shape_cast %176 : vector<1x1x16x128xf32> to vector<16x128xf32>
      %178 = arith.select %169, %177, %26 : vector<16x128xi1>, vector<16x128xf32>
      %c0_184 = arith.constant 0 : index
      %c1_185 = arith.constant 1 : index
      %c96_186 = arith.constant 96 : index
      %c0_187 = arith.constant 0 : index
      %179 = vector.load %arg6[%c0_184, %c1_185, %c96_186, %c0_187] : memref<1x3x128x128xf32, #tpu.memory_space<vmem>>, vector<1x1x16x128xf32>
      %180 = vector.shape_cast %179 : vector<1x1x16x128xf32> to vector<16x128xf32>
      %181 = vector.shape_cast %178 : vector<16x128xf32> to vector<1x1x16x128xf32>
      tpu.vector_store %arg6[%c0_184, %c1_185, %c96_186, %c0_187], %181 {strides = array<i32>} : memref<1x3x128x128xf32, #tpu.memory_space<vmem>>, vector<1x1x16x128xf32>,
      %c0_188 = arith.constant 0 : index
      %c2_189 = arith.constant 2 : index
      %c0_190 = arith.constant 0 : index
      %c0_191 = arith.constant 0 : index
      %182 = vector.load %arg3[%c0_188, %c2_189, %c0_190, %c0_191] : memref<1x3x16x128xf32, #tpu.memory_space<vmem>>, vector<1x1x16x128xf32>
      %183 = vector.shape_cast %182 : vector<1x1x16x128xf32> to vector<16x128xf32>
      %184 = arith.select %169, %183, %26 : vector<16x128xi1>, vector<16x128xf32>
      %c0_192 = arith.constant 0 : index
      %c2_193 = arith.constant 2 : index
      %c96_194 = arith.constant 96 : index
      %c0_195 = arith.constant 0 : index
      %185 = vector.load %arg6[%c0_192, %c2_193, %c96_194, %c0_195] : memref<1x3x128x128xf32, #tpu.memory_space<vmem>>, vector<1x1x16x128xf32>
      %186 = vector.shape_cast %185 : vector<1x1x16x128xf32> to vector<16x128xf32>
      %187 = vector.shape_cast %184 : vector<16x128xf32> to vector<1x1x16x128xf32>
      tpu.vector_store %arg6[%c0_192, %c2_193, %c96_194, %c0_195], %187 {strides = array<i32>} : memref<1x3x128x128xf32, #tpu.memory_space<vmem>>, vector<1x1x16x128xf32>,
      %c112_i32_196 = arith.constant 112 : i32
      %188 = vector.broadcast %c112_i32_196 : i32 to vector<16x128xi32>
      %189 = arith.cmpi sge, %25, %188 : vector<16x128xi32>
      %c128_i32 = arith.constant 128 : i32
      %190 = vector.broadcast %c128_i32 : i32 to vector<16x128xi32>
      %191 = arith.cmpi slt, %25, %190 : vector<16x128xi32>
      %192 = arith.andi %189, %191 : vector<16x128xi1>
      %c0_197 = arith.constant 0 : index
      %c0_198 = arith.constant 0 : index
      %c0_199 = arith.constant 0 : index
      %c0_200 = arith.constant 0 : index
      %193 = vector.load %arg3[%c0_197, %c0_198, %c0_199, %c0_200] : memref<1x3x16x128xf32, #tpu.memory_space<vmem>>, vector<1x1x16x128xf32>
      %194 = vector.shape_cast %193 : vector<1x1x16x128xf32> to vector<16x128xf32>
      %195 = arith.select %192, %194, %26 : vector<16x128xi1>, vector<16x128xf32>
      %c0_201 = arith.constant 0 : index
      %c0_202 = arith.constant 0 : index
      %c112 = arith.constant 112 : index
      %c0_203 = arith.constant 0 : index
      %196 = vector.load %arg6[%c0_201, %c0_202, %c112, %c0_203] : memref<1x3x128x128xf32, #tpu.memory_space<vmem>>, vector<1x1x16x128xf32>
      %197 = vector.shape_cast %196 : vector<1x1x16x128xf32> to vector<16x128xf32>
      %198 = vector.shape_cast %195 : vector<16x128xf32> to vector<1x1x16x128xf32>
      tpu.vector_store %arg6[%c0_201, %c0_202, %c112, %c0_203], %198 {strides = array<i32>} : memref<1x3x128x128xf32, #tpu.memory_space<vmem>>, vector<1x1x16x128xf32>,
      %c0_204 = arith.constant 0 : index
      %c1_205 = arith.constant 1 : index
      %c0_206 = arith.constant 0 : index
      %c0_207 = arith.constant 0 : index
      %199 = vector.load %arg3[%c0_204, %c1_205, %c0_206, %c0_207] : memref<1x3x16x128xf32, #tpu.memory_space<vmem>>, vector<1x1x16x128xf32>
      %200 = vector.shape_cast %199 : vector<1x1x16x128xf32> to vector<16x128xf32>
      %201 = arith.select %192, %200, %26 : vector<16x128xi1>, vector<16x128xf32>
      %c0_208 = arith.constant 0 : index
      %c1_209 = arith.constant 1 : index
      %c112_210 = arith.constant 112 : index
      %c0_211 = arith.constant 0 : index
      %202 = vector.load %arg6[%c0_208, %c1_209, %c112_210, %c0_211] : memref<1x3x128x128xf32, #tpu.memory_space<vmem>>, vector<1x1x16x128xf32>
      %203 = vector.shape_cast %202 : vector<1x1x16x128xf32> to vector<16x128xf32>
      %204 = vector.shape_cast %201 : vector<16x128xf32> to vector<1x1x16x128xf32>
      tpu.vector_store %arg6[%c0_208, %c1_209, %c112_210, %c0_211], %204 {strides = array<i32>} : memref<1x3x128x128xf32, #tpu.memory_space<vmem>>, vector<1x1x16x128xf32>,
      %c0_212 = arith.constant 0 : index
      %c2_213 = arith.constant 2 : index
      %c0_214 = arith.constant 0 : index
      %c0_215 = arith.constant 0 : index
      %205 = vector.load %arg3[%c0_212, %c2_213, %c0_214, %c0_215] : memref<1x3x16x128xf32, #tpu.memory_space<vmem>>, vector<1x1x16x128xf32>
      %206 = vector.shape_cast %205 : vector<1x1x16x128xf32> to vector<16x128xf32>
      %207 = arith.select %192, %206, %26 : vector<16x128xi1>, vector<16x128xf32>
      %c0_216 = arith.constant 0 : index
      %c2_217 = arith.constant 2 : index
      %c112_218 = arith.constant 112 : index
      %c0_219 = arith.constant 0 : index
      %208 = vector.load %arg6[%c0_216, %c2_217, %c112_218, %c0_219] : memref<1x3x128x128xf32, #tpu.memory_space<vmem>>, vector<1x1x16x128xf32>
      %209 = vector.shape_cast %208 : vector<1x1x16x128xf32> to vector<16x128xf32>
      %210 = vector.shape_cast %207 : vector<16x128xf32> to vector<1x1x16x128xf32>
      tpu.vector_store %arg6[%c0_216, %c2_217, %c112_218, %c0_219], %210 {strides = array<i32>} : memref<1x3x128x128xf32, #tpu.memory_space<vmem>>, vector<1x1x16x128xf32>,
    } else {
    }
    %c0 = arith.constant 0 : index
    %c0_1 = arith.constant 0 : index
    %c0_2 = arith.constant 0 : index
    %3 = vector.load %arg2[%c0, %c0_1, %c0_2] : memref<1x5x128xf32, #tpu.memory_space<vmem>>, vector<1x5x128xf32>
    %4 = vector.shape_cast %3 : vector<1x5x128xf32> to vector<5x128xf32>
    %c0_3 = arith.constant 0 : index
    %c0_4 = arith.constant 0 : index
    %5 = vector.load %arg4[%c0_3, %c0_4] : memref<24x5xf32, #tpu.memory_space<vmem>>, vector<8x5xf32>
    %cst = arith.constant dense<0.000000e+00> : vector<8x128xf32>
    %6 = tpu.matmul %5, %4, %cst {dimension_numbers = #tpu.dot_dimension_numbers<[1], [0], [0], [1], [0, 0, 1, 1], [], []>} : vector<8x5xf32>, vector<5x128xf32>, vector<8x128xf32> -> vector<8x128xf32>
    %c0_5 = arith.constant 0 : index
    %c0_6 = arith.constant 0 : index
    %c0_7 = arith.constant 0 : index
    %c0_8 = arith.constant 0 : index
    %7 = vector.load %arg6[%c0_5, %c0_6, %c0_7, %c0_8] : memref<1x3x128x128xf32, #tpu.memory_space<vmem>>, vector<1x1x128x128xf32>
    %8 = vector.shape_cast %7 : vector<1x1x128x128xf32> to vector<128x128xf32>
    %cst_9 = arith.constant dense<0.000000e+00> : vector<8x128xf32>
    %9 = tpu.matmul %6, %8, %cst_9 {dimension_numbers = #tpu.dot_dimension_numbers<[1], [0], [0], [1], [0, 0, 1, 1], [], []>} : vector<8x128xf32>, vector<128x128xf32>, vector<8x128xf32> -> vector<8x128xf32>
    %c8 = arith.constant 8 : index
    %c0_10 = arith.constant 0 : index
    %10 = vector.load %arg4[%c8, %c0_10] : memref<24x5xf32, #tpu.memory_space<vmem>>, vector<8x5xf32>
    %cst_11 = arith.constant dense<0.000000e+00> : vector<8x128xf32>
    %11 = tpu.matmul %10, %4, %cst_11 {dimension_numbers = #tpu.dot_dimension_numbers<[1], [0], [0], [1], [0, 0, 1, 1], [], []>} : vector<8x5xf32>, vector<5x128xf32>, vector<8x128xf32> -> vector<8x128xf32>
    %c0_12 = arith.constant 0 : index
    %c1 = arith.constant 1 : index
    %c0_13 = arith.constant 0 : index
    %c0_14 = arith.constant 0 : index
    %12 = vector.load %arg6[%c0_12, %c1, %c0_13, %c0_14] : memref<1x3x128x128xf32, #tpu.memory_space<vmem>>, vector<1x1x128x128xf32>
    %13 = vector.shape_cast %12 : vector<1x1x128x128xf32> to vector<128x128xf32>
    %cst_15 = arith.constant dense<0.000000e+00> : vector<8x128xf32>
    %14 = tpu.matmul %11, %13, %cst_15 {dimension_numbers = #tpu.dot_dimension_numbers<[1], [0], [0], [1], [0, 0, 1, 1], [], []>} : vector<8x128xf32>, vector<128x128xf32>, vector<8x128xf32> -> vector<8x128xf32>
    %15 = arith.addf %9, %14 : vector<8x128xf32>
    %c16 = arith.constant 16 : index
    %c0_16 = arith.constant 0 : index
    %16 = vector.load %arg4[%c16, %c0_16] : memref<24x5xf32, #tpu.memory_space<vmem>>, vector<8x5xf32>
    %cst_17 = arith.constant dense<0.000000e+00> : vector<8x128xf32>
    %17 = tpu.matmul %16, %4, %cst_17 {dimension_numbers = #tpu.dot_dimension_numbers<[1], [0], [0], [1], [0, 0, 1, 1], [], []>} : vector<8x5xf32>, vector<5x128xf32>, vector<8x128xf32> -> vector<8x128xf32>
    %c0_18 = arith.constant 0 : index
    %c2 = arith.constant 2 : index
    %c0_19 = arith.constant 0 : index
    %c0_20 = arith.constant 0 : index
    %18 = vector.load %arg6[%c0_18, %c2, %c0_19, %c0_20] : memref<1x3x128x128xf32, #tpu.memory_space<vmem>>, vector<1x1x128x128xf32>
    %19 = vector.shape_cast %18 : vector<1x1x128x128xf32> to vector<128x128xf32>
    %cst_21 = arith.constant dense<0.000000e+00> : vector<8x128xf32>
    %20 = tpu.matmul %17, %19, %cst_21 {dimension_numbers = #tpu.dot_dimension_numbers<[1], [0], [0], [1], [0, 0, 1, 1], [], []>} : vector<8x128xf32>, vector<128x128xf32>, vector<8x128xf32> -> vector<8x128xf32>
    %21 = arith.addf %15, %20 : vector<8x128xf32>
    %c0_22 = arith.constant 0 : index
    %c0_23 = arith.constant 0 : index
    %c0_24 = arith.constant 0 : index
    %22 = vector.load %arg5[%c0_22, %c0_23, %c0_24] : memref<1x8x128xf32, #tpu.memory_space<vmem>>, vector<1x8x128xf32>
    %23 = vector.shape_cast %22 : vector<1x8x128xf32> to vector<8x128xf32>
    %24 = vector.shape_cast %21 : vector<8x128xf32> to vector<1x8x128xf32>
    tpu.vector_store %arg5[%c0_22, %c0_23, %c0_24], %24 {strides = array<i32>} : memref<1x8x128xf32, #tpu.memory_space<vmem>>, vector<1x8x128xf32>,
    return
  }
  func.func @transform_0(%arg0: i32, %arg1: i32) -> (i32, i32, i32) {
    %c0_i32 = arith.constant 0 : i32
    %c0_i32_0 = arith.constant 0 : i32
    return %arg0, %c0_i32, %arg1 : i32, i32, i32
  }
  func.func @transform_1(%arg0: i32, %arg1: i32) -> (i32, i32, i32, i32) {
    %c0_i32 = arith.constant 0 : i32
    %c0_i32_0 = arith.constant 0 : i32
    %c0_i32_1 = arith.constant 0 : i32
    %c0_i32_2 = arith.constant 0 : i32
    return %arg0, %c0_i32, %c0_i32_0, %c0_i32_1 : i32, i32, i32, i32
  }
  func.func @transform_2(%arg0: i32, %arg1: i32) -> (i32, i32) {
    %c0_i32 = arith.constant 0 : i32
    %c0_i32_0 = arith.constant 0 : i32
    %c0_i32_1 = arith.constant 0 : i32
    return %c0_i32, %c0_i32_0 : i32, i32
  }
  func.func @transform_3(%arg0: i32, %arg1: i32) -> (i32, i32, i32) {
    %c0_i32 = arith.constant 0 : i32
    %c0_i32_0 = arith.constant 0 : i32
    return %arg0, %c0_i32, %arg1 : i32, i32, i32
  }
}

</mosaic_0001>

<llo_original>
// kernel: tpu_custom_call.1
$region0: #{tpu_custom_call.1}
  #allocation0 [shape = 'u32[]', space=smem, size = 0x4, offset = 0x4, fixed_abs, tag = 'smem constant byte address 0x4 - core index']
  #allocation1 [shape = 'u32[144,128]{1,0:T(1,128)}', space=vmem, size = 0x12000, scoped, tag = 'internal scratch']
  #allocation2 [shape = 'f32[1,3,128,128]{3,2,1,0:T(8,128)}', space=vmem, size = 0x30000, scoped, tag = 'scratch operand']
  %s0 = inlined_call_operand.vmem [shape: f32[2,5,128], index: 0, kind: input, shape index: {}]
  %s1 = inlined_call_operand.hbm [shape: f32[2,3,16,128], index: 1, kind: input, shape index: {}]
  %s2 = inlined_call_operand.vmem [shape: f32[24,5], index: 2, kind: input, shape index: {}]
  %s3 = inlined_call_operand.hbm [shape: f32[2,8,128], index: 3, kind: output, shape index: {}]
  %s4 = sld [smem:[#allocation0]]
  $region53: #{tpu_custom_call.1} parent=0
    _
  %s6 = ssub.s32 1, %s4
  %s7 = scalar_select 0, %s6, %s4
  $region1: #{tpu_custom_call.1} parent=0
    #allocation3 [shape = 'u8[49152]{0}', space=vmem, size = 0xc000, scoped, tag = 'input window, operand 1']
    #allocation4 [shape = 's32[2]{0}', space=sflag, size = 0x8, scoped, tag = 'scoped memory for tpu_custom_call.1']
    #allocation5 [shape = 's32[2]{0}', space=sflag, size = 0x8, scoped, tag = 'scoped memory for tpu_custom_call.1']
    #allocation6 [shape = 'u8[8192]{0}', space=vmem, size = 0x2000, scoped, tag = 'output window, operand 0']
    %8 = vsyncpa [#allocation4], 0
    %s9 = scalar_lea.sflag [#allocation4], 1
    %10 = vsyncpa %s9, 0
    %11 = vsyncpa [#allocation5], 0
    %s12 = scalar_lea.sflag [#allocation5], 1
    %13 = vsyncpa %s12, 0
    loop: start=0, step=1, limit=4
    $region2: #{tpu_custom_call.1} parent=1 // loop_pre_header
      _
    $region3: #{tpu_custom_call.1} parent=1 // loop_header
      %s15 = sphi 0, %s19
      %p16 = scmp.ge.s32.totalorder %s15, 4
      %s22 = sphi 0, %s34
      %s23 = sphi 0, %s30
      %s24 = sphi 0, %s22
      %s25 = sphi 0, %s23
      %s26 = sphi 0, %s24
      %s27 = sphi 0, %s25
      %s39 = sphi 0, %s41
      %s42 = sphi 0, %s39
      %s43 = sphi 0, %s42
      %s59 = sphi 0, %s43
      %s65 = sphi 0, %s67
      %s68 = sphi 0, %s65
      %s69 = sphi 0, %s68
      %s85 = sphi 0, %s69
      %s89 = sphi 0, %s89
      %s91 = sphi 0, %s89
      %s92 = sphi 0, %s91
      %s106 = sphi 0, %s92
      %s114 = sphi 0, %s116
      %s117 = sphi 0, %s114
      %s118 = sphi 0, %s117
      %s134 = sphi 0, %s118
    $region4: #{tpu_custom_call.1} parent=1 // loop_header_branch
      %18 = sbr.rel (%p16) target = $region8
    $region5: #{tpu_custom_call.1} parent=1 // loop_body
      %s20 = ssub.s32 %s15, 1
      %s21 = ssub.s32 %s15, 2
      %s28 = sadd.s32 1, %s23
      %p29 = scmp.ge.s32.totalorder %s28, 1
      %s30 = scalar_select %p29, 0, %s28
      %s31 = sadd.s32 1, %s22
      %s32 = scalar_select %p29, %s31, %s22
      %p33 = scmp.ge.s32.totalorder %s32, 2
      %s34 = scalar_select %p33, 0, %s32
      %s35 = ssub.s32 %s22, %s34
      %s36 = ssub.s32 %s23, %s30
      %s37 = sor.u32 %s35, %s36
      %p38 = scmp.eq.s32.totalorder %s37, 0
      %s40 = sadd.s32 %s39, 1
      %s41 = scalar_select %p38, %s39, %s40
      %p44 = pneg %p38
      %p45 = scmp.eq.s32.totalorder %s15, 1
      %p46 = por %p44, %p45
      %p47 = scmp.ne.s32.totalorder %s39, %s42
      %p48 = scmp.eq.s32.totalorder %s15, 0
      %p49 = por %p47, %p48
      %p50 = scmp.ne.s32.totalorder %s39, %s42
      %p51 = scmp.eq.s32.totalorder %s20, 1
      %p52 = por %p50, %p51
      %p53 = scmp.ne.s32.totalorder %s42, %s43
      %p54 = scmp.eq.s32.totalorder %s20, 0
      %p55 = por %p53, %p54
      %p56 = scmp.ne.s32.totalorder %s42, %s43
      %p57 = scmp.eq.s32.totalorder %s21, 1
      %p58 = por %p56, %p57
      %p60 = scmp.ne.s32.totalorder %s43, %s59
      %p61 = scmp.eq.s32.totalorder %s21, 0
      %p62 = por %p60, %p61
      %s63 = ssub.s32 %s22, %s34
      %p64 = scmp.eq.s32.totalorder %s63, 0
      %s66 = sadd.s32 %s65, 1
      %s67 = scalar_select %p64, %s65, %s66
      %p70 = pneg %p64
      %p71 = scmp.eq.s32.totalorder %s15, 1
      %p72 = por %p70, %p71
      %p73 = scmp.ne.s32.totalorder %s65, %s68
      %p74 = scmp.eq.s32.totalorder %s15, 0
      %p75 = por %p73, %p74
      %p76 = scmp.ne.s32.totalorder %s65, %s68
      %p77 = scmp.eq.s32.totalorder %s20, 1
      %p78 = por %p76, %p77
      %p79 = scmp.ne.s32.totalorder %s68, %s69
      %p80 = scmp.eq.s32.totalorder %s20, 0
      %p81 = por %p79, %p80
      %p82 = scmp.ne.s32.totalorder %s68, %s69
      %p83 = scmp.eq.s32.totalorder %s21, 1
      %p84 = por %p82, %p83
      %p86 = scmp.ne.s32.totalorder %s69, %s85
      %p87 = scmp.eq.s32.totalorder %s21, 0
      %p88 = por %p86, %p87
      %s90 = sadd.s32 %s89, 1
      %p93 = scmp.eq.s32.totalorder %s15, 1
      %p94 = scmp.ne.s32.totalorder %s89, %s91
      %p95 = scmp.eq.s32.totalorder %s15, 0
      %p96 = por %p94, %p95
      %p97 = scmp.ne.s32.totalorder %s89, %s91
      %p98 = scmp.eq.s32.totalorder %s20, 1
      %p99 = por %p97, %p98
      %p100 = scmp.ne.s32.totalorder %s91, %s92
      %p101 = scmp.eq.s32.totalorder %s20, 0
      %p102 = por %p100, %p101
      %p103 = scmp.ne.s32.totalorder %s91, %s92
      %p104 = scmp.eq.s32.totalorder %s21, 1
      %p105 = por %p103, %p104
      %p107 = scmp.ne.s32.totalorder %s92, %s106
      %p108 = scmp.eq.s32.totalorder %s21, 0
      %p109 = por %p107, %p108
      %s110 = ssub.s32 %s22, %s34
      %s111 = ssub.s32 %s23, %s30
      %s112 = sor.u32 %s110, %s111
      %p113 = scmp.eq.s32.totalorder %s112, 0
      %s115 = sadd.s32 %s114, 1
      %s116 = scalar_select %p113, %s114, %s115
      %p119 = pneg %p113
      %p120 = scmp.eq.s32.totalorder %s15, 1
      %p121 = por %p119, %p120
      %p122 = scmp.ne.s32.totalorder %s114, %s117
      %p123 = scmp.eq.s32.totalorder %s15, 0
      %p124 = por %p122, %p123
      %p125 = scmp.ne.s32.totalorder %s114, %s117
      %p126 = scmp.eq.s32.totalorder %s20, 1
      %p127 = por %p125, %p126
      %p128 = scmp.ne.s32.totalorder %s117, %s118
      %p129 = scmp.eq.s32.totalorder %s20, 0
      %p130 = por %p128, %p129
      %p131 = scmp.ne.s32.totalorder %s117, %s118
      %p132 = scmp.eq.s32.totalorder %s21, 1
      %p133 = por %p131, %p132
      %p135 = scmp.ne.s32.totalorder %s118, %s134
      %p136 = scmp.eq.s32.totalorder %s21, 0
      %p137 = por %p135, %p136
      %p138 = scmp.le.s32.totalorder 1, %s15
      %p139 = scmp.lt.s32.totalorder %s15, 3
      %p140 = pnand %p138, %p139
      %p141 = pneg %p140
      // Predicated region
      $region9: #{tpu_custom_call.1} parent=5 // pred_check
        _
      $region10: #{tpu_custom_call.1} parent=5 // pred_check_branch
        %143 = sbr.rel (%p140) target = $region12
      $region11: #{tpu_custom_call.1} parent=5 // pred_region
        %s144 = ssub.s32 %s15, 1
        // Predicated region
        $region13: #{tpu_custom_call.1} parent=11 // pred_check
          %p145 = pneg %p102
        $region14: #{tpu_custom_call.1} parent=11 // pred_check_branch
          %147 = sbr.rel (%p145) target = $region16
        $region15: #{tpu_custom_call.1} parent=11 // pred_region
          _
        $region16: #{tpu_custom_call.1} parent=11 // pred_fallthru
          _
      $region12: #{tpu_custom_call.1} parent=5 // pred_fallthru
        _
      %p148 = scmp.lt.s32.totalorder %s15, 2
      // Predicated region
      $region17: #{tpu_custom_call.1} parent=5 // pred_check
        %p149 = pneg %p148
      $region18: #{tpu_custom_call.1} parent=5 // pred_check_branch
        %151 = sbr.rel (%p149) target = $region20
      $region19: #{tpu_custom_call.1} parent=5 // pred_region
        // Predicated region
        $region21: #{tpu_custom_call.1} parent=19 // pred_check
          %p152 = pneg %p49
        $region22: #{tpu_custom_call.1} parent=19 // pred_check_branch
          %154 = sbr.rel (%p152) target = $region24
        $region23: #{tpu_custom_call.1} parent=19 // pred_region
          %p155 = scmp.lt.s32.totalorder %s22, 1
          %s156 = scalar_select %p155, %s22, 1
          %p157 = scmp.lt.s32.totalorder %s23, 0
          %s158 = scalar_select %p157, %s23, 0
          %s159 = sadd.s32 %s158, %s156
          %s160 = smul.addr %s159, 8
          %s161 = scalar_lea.vmem %s0, %s160
        $region24: #{tpu_custom_call.1} parent=19 // pred_fallthru
          _
        // Predicated region
        $region25: #{tpu_custom_call.1} parent=19 // pred_check
          %p162 = pneg %p75
        $region26: #{tpu_custom_call.1} parent=19 // pred_check_branch
          %164 = sbr.rel (%p162) target = $region28
        $region27: #{tpu_custom_call.1} parent=19 // pred_region
          %s165 = sand.u32 %s65, 1
          %s166 = scalar_lea.sflag [#allocation4], %s165
          %s167 = sand.u32 %s65, 1
          %s168 = smul.addr %s167, 48
          %s169 = scalar_lea.vmem [#allocation3], %s168
          %s171 = ssub.s32 768, 768
          %172 = vsyncadd %s166, %s171
          %s173 = smul.addr %s22, 6
          %s174 = smul.addr %s173, 128
          %s175 = scalar_lea.hbm %s1, %s174
          %s176 = sshll.u32 %s169, 4
          %s177 = int_to_ptr.vmem [resolvable:$true] %s176
          %182 = dma.hbm_to_vmem [thread:$0]  %s175, 768, %s177, %s166, 128, 128, 8
        $region28: #{tpu_custom_call.1} parent=19 // pred_fallthru
          _
      $region20: #{tpu_custom_call.1} parent=5 // pred_fallthru
        _
      %p183 = scmp.le.s32.totalorder 1, %s15
      %p184 = scmp.lt.s32.totalorder %s15, 3
      %p185 = pnand %p183, %p184
      %p186 = pneg %p185
      // Predicated region
      $region29: #{tpu_custom_call.1} parent=5 // pred_check
        _
      $region30: #{tpu_custom_call.1} parent=5 // pred_check_branch
        %188 = sbr.rel (%p185) target = $region32
      $region31: #{tpu_custom_call.1} parent=5 // pred_region
        %s189 = ssub.s32 %s15, 1
        %s190 = sand.u32 %s68, 1
        %s191 = scalar_lea.sflag [#allocation4], %s190
        %s192 = sand.u32 %s68, 1
        %s193 = smul.addr %s192, 48
        %s194 = scalar_lea.vmem [#allocation3], %s193
        // Predicated region
        $region33: #{tpu_custom_call.1} parent=31 // pred_check
          %p195 = pneg %p81
        $region34: #{tpu_custom_call.1} parent=31 // pred_check_branch
          %197 = sbr.rel (%p195) target = $region36
        $region35: #{tpu_custom_call.1} parent=31 // pred_region
          %198 = dma.done %s191, 768
        $region36: #{tpu_custom_call.1} parent=31 // pred_fallthru
          _
        %p199 = scmp.lt.s32.totalorder %s24, 1
        %s200 = scalar_select %p199, %s24, 1
        %p201 = scmp.lt.s32.totalorder %s25, 0
        %s202 = scalar_select %p201, %s25, 0
        %s203 = sadd.s32 %s202, %s200
        %s204 = smul.addr %s203, 8
        %s205 = scalar_lea.vmem %s0, %s204
        %p206 = pneg %p55
        %p207 = pneg %p52
        %s208 = sand.u32 %s68, 1
        %s209 = scalar_lea.sflag [#allocation4], %s208
        %s210 = sand.u32 %s68, 1
        %s211 = smul.addr %s210, 48
        %s212 = scalar_lea.vmem [#allocation3], %s211
        %p213 = pneg %p81
        %p214 = pneg %p78
        %p215 = pneg %p102
        %p216 = pneg %p99
        %p217 = pneg %p130
        %p218 = pneg %p127
        %s219 = sand.u32 %s117, 1
        %s220 = scalar_lea.sflag [#allocation5], %s219
        %s221 = sand.u32 %s117, 1
        %s222 = smul.addr %s221, 8
        %s223 = scalar_lea.vmem [#allocation6], %s222
        %p224 = scmp.lt.s32.totalorder %s24, 1
        %s225 = scalar_select %p224, %s24, 1
        %p226 = scmp.lt.s32.totalorder %s25, 0
        %s227 = scalar_select %p226, %s25, 0
        %s228 = sadd.s32 %s227, %s225
        %s229 = smul.addr %s228, 8
        %s230 = scalar_lea.vmem %s0, %s229
        %p231 = scmp.eq.s32.totalorder %s25, 0
        // Predicated region
        $region37: #{tpu_custom_call.1} parent=31 // pred_check
          %p232 = pneg %p231
        $region38: #{tpu_custom_call.1} parent=31 // pred_check_branch
          %234 = sbr.rel (%p232) target = $region40
        $region39: #{tpu_custom_call.1} parent=31 // pred_region
          %v235 = vlaneseq
          %v236 = vand.u32 %v235, 127
          %vm237 = vcmp.ge.s32.totalorder %v236, 0
          %vm238 = vcmp.lt.s32.totalorder %v236, 16
          %vm239 = vmand %vm237, %vm238
          %v240 = vld [vmem:[%s194] sm:$0xff]
          %v241 = vld [vmem:[%s194 + $0x8] sm:$0xff]
          %v242 = vsel %vm239, %v240, 0.0
          %v243 = vsel %vm239, %v241, 0.0
          %244 = vst [vmem:[#allocation2] sm:$0xff] %v242
          %245 = vst [vmem:[#allocation2 + $0x8] sm:$0xff] %v243
          %s246 = scalar_lea.vmem %s194, 16 [#allocation3]
          %v247 = vld [vmem:[%s246] sm:$0xff]
          %v248 = vld [vmem:[%s246 + $0x8] sm:$0xff]
          %v249 = vsel %vm239, %v247, 0.0
          %v250 = vsel %vm239, %v248, 0.0
          %s251 = scalar_lea.vmem [#allocation2], 128
          %252 = vst [vmem:[%s251] sm:$0xff] %v249
          %253 = vst [vmem:[%s251 + $0x8] sm:$0xff] %v250
          %s254 = scalar_lea.vmem %s194, 32 [#allocation3]
          %v255 = vld [vmem:[%s254] sm:$0xff]
          %v256 = vld [vmem:[%s254 + $0x8] sm:$0xff]
          %v257 = vsel %vm239, %v255, 0.0
          %v258 = vsel %vm239, %v256, 0.0
          %s259 = scalar_lea.vmem [#allocation2], 256
          %260 = vst [vmem:[%s259] sm:$0xff] %v257
          %261 = vst [vmem:[%s259 + $0x8] sm:$0xff] %v258
          %vm262 = vcmp.ge.s32.totalorder %v236, 16
          %vm263 = vcmp.lt.s32.totalorder %v236, 32
          %vm264 = vmand %vm262, %vm263
          %v265 = vld [vmem:[%s194] sm:$0xff]
          %v266 = vld [vmem:[%s194 + $0x8] sm:$0xff]
          %v267 = vsel %vm264, %v265, 0.0
          %v268 = vsel %vm264, %v266, 0.0
          %269 = vst [vmem:[#allocation2 + $0x10] sm:$0xff] %v267
          %270 = vst [vmem:[#allocation2 + $0x18] sm:$0xff] %v268
          %v271 = vld [vmem:[%s246] sm:$0xff]
          %v272 = vld [vmem:[%s246 + $0x8] sm:$0xff]
          %v273 = vsel %vm264, %v271, 0.0
          %v274 = vsel %vm264, %v272, 0.0
          %275 = vst [vmem:[%s251 + $0x10] sm:$0xff] %v273
          %276 = vst [vmem:[%s251 + $0x18] sm:$0xff] %v274
          %v277 = vld [vmem:[%s254] sm:$0xff]
          %v278 = vld [vmem:[%s254 + $0x8] sm:$0xff]
          %v279 = vsel %vm264, %v277, 0.0
          %v280 = vsel %vm264, %v278, 0.0
          %281 = vst [vmem:[%s259 + $0x10] sm:$0xff] %v279
          %282 = vst [vmem:[%s259 + $0x18] sm:$0xff] %v280
          %vm283 = vcmp.ge.s32.totalorder %v236, 32
          %vm284 = vcmp.lt.s32.totalorder %v236, 48
          %vm285 = vmand %vm283, %vm284
          %v286 = vld [vmem:[%s194] sm:$0xff]
          %v287 = vld [vmem:[%s194 + $0x8] sm:$0xff]
          %v288 = vsel %vm285, %v286, 0.0
          %v289 = vsel %vm285, %v287, 0.0
          %290 = vst [vmem:[#allocation2 + $0x20] sm:$0xff] %v288
          %291 = vst [vmem:[#allocation2 + $0x28] sm:$0xff] %v289
          %v292 = vld [vmem:[%s246] sm:$0xff]
          %v293 = vld [vmem:[%s246 + $0x8] sm:$0xff]
          %v294 = vsel %vm285, %v292, 0.0
          %v295 = vsel %vm285, %v293, 0.0
          %296 = vst [vmem:[%s251 + $0x20] sm:$0xff] %v294
          %297 = vst [vmem:[%s251 + $0x28] sm:$0xff] %v295
          %v298 = vld [vmem:[%s254] sm:$0xff]
          %v299 = vld [vmem:[%s254 + $0x8] sm:$0xff]
          %v300 = vsel %vm285, %v298, 0.0
          %v301 = vsel %vm285, %v299, 0.0
          %302 = vst [vmem:[%s259 + $0x20] sm:$0xff] %v300
          %303 = vst [vmem:[%s259 + $0x28] sm:$0xff] %v301
          %vm304 = vcmp.ge.s32.totalorder %v236, 48
          %vm305 = vcmp.lt.s32.totalorder %v236, 64
          %vm306 = vmand %vm304, %vm305
          %v307 = vld [vmem:[%s194] sm:$0xff]
          %v308 = vld [vmem:[%s194 + $0x8] sm:$0xff]
          %v309 = vsel %vm306, %v307, 0.0
          %v310 = vsel %vm306, %v308, 0.0
          %311 = vst [vmem:[#allocation2 + $0x30] sm:$0xff] %v309
          %312 = vst [vmem:[#allocation2 + $0x38] sm:$0xff] %v310
          %v313 = vld [vmem:[%s246] sm:$0xff]
          %v314 = vld [vmem:[%s246 + $0x8] sm:$0xff]
          %v315 = vsel %vm306, %v313, 0.0
          %v316 = vsel %vm306, %v314, 0.0
          %317 = vst [vmem:[%s251 + $0x30] sm:$0xff] %v315
          %318 = vst [vmem:[%s251 + $0x38] sm:$0xff] %v316
          %v319 = vld [vmem:[%s254] sm:$0xff]
          %v320 = vld [vmem:[%s254 + $0x8] sm:$0xff]
          %v321 = vsel %vm306, %v319, 0.0
          %v322 = vsel %vm306, %v320, 0.0
          %323 = vst [vmem:[%s259 + $0x30] sm:$0xff] %v321
          %324 = vst [vmem:[%s259 + $0x38] sm:$0xff] %v322
          %vm325 = vcmp.ge.s32.totalorder %v236, 64
          %vm326 = vcmp.lt.s32.totalorder %v236, 80
          %vm327 = vmand %vm325, %vm326
          %v328 = vld [vmem:[%s194] sm:$0xff]
          %v329 = vld [vmem:[%s194 + $0x8] sm:$0xff]
          %v330 = vsel %vm327, %v328, 0.0
          %v331 = vsel %vm327, %v329, 0.0
          %332 = vst [vmem:[#allocation2 + $0x40] sm:$0xff] %v330
          %333 = vst [vmem:[#allocation2 + $0x48] sm:$0xff] %v331
          %v334 = vld [vmem:[%s246] sm:$0xff]
          %v335 = vld [vmem:[%s246 + $0x8] sm:$0xff]
          %v336 = vsel %vm327, %v334, 0.0
          %v337 = vsel %vm327, %v335, 0.0
          %338 = vst [vmem:[%s251 + $0x40] sm:$0xff] %v336
          %339 = vst [vmem:[%s251 + $0x48] sm:$0xff] %v337
          %v340 = vld [vmem:[%s254] sm:$0xff]
          %v341 = vld [vmem:[%s254 + $0x8] sm:$0xff]
          %v342 = vsel %vm327, %v340, 0.0
          %v343 = vsel %vm327, %v341, 0.0
          %344 = vst [vmem:[%s259 + $0x40] sm:$0xff] %v342
          %345 = vst [vmem:[%s259 + $0x48] sm:$0xff] %v343
          %vm346 = vcmp.ge.s32.totalorder %v236, 80
          %vm347 = vcmp.lt.s32.totalorder %v236, 96
          %vm348 = vmand %vm346, %vm347
          %v349 = vld [vmem:[%s194] sm:$0xff]
          %v350 = vld [vmem:[%s194 + $0x8] sm:$0xff]
          %v351 = vsel %vm348, %v349, 0.0
          %v352 = vsel %vm348, %v350, 0.0
          %353 = vst [vmem:[#allocation2 + $0x50] sm:$0xff] %v351
          %354 = vst [vmem:[#allocation2 + $0x58] sm:$0xff] %v352
          %v355 = vld [vmem:[%s246] sm:$0xff]
          %v356 = vld [vmem:[%s246 + $0x8] sm:$0xff]
          %v357 = vsel %vm348, %v355, 0.0
          %v358 = vsel %vm348, %v356, 0.0
          %359 = vst [vmem:[%s251 + $0x50] sm:$0xff] %v357
          %360 = vst [vmem:[%s251 + $0x58] sm:$0xff] %v358
          %v361 = vld [vmem:[%s254] sm:$0xff]
          %v362 = vld [vmem:[%s254 + $0x8] sm:$0xff]
          %v363 = vsel %vm348, %v361, 0.0
          %v364 = vsel %vm348, %v362, 0.0
          %365 = vst [vmem:[%s259 + $0x50] sm:$0xff] %v363
          %366 = vst [vmem:[%s259 + $0x58] sm:$0xff] %v364
          %vm367 = vcmp.ge.s32.totalorder %v236, 96
          %vm368 = vcmp.lt.s32.totalorder %v236, 112
          %vm369 = vmand %vm367, %vm368
          %v370 = vld [vmem:[%s194] sm:$0xff]
          %v371 = vld [vmem:[%s194 + $0x8] sm:$0xff]
          %v372 = vsel %vm369, %v370, 0.0
          %v373 = vsel %vm369, %v371, 0.0
          %374 = vst [vmem:[#allocation2 + $0x60] sm:$0xff] %v372
          %375 = vst [vmem:[#allocation2 + $0x68] sm:$0xff] %v373
          %v376 = vld [vmem:[%s246] sm:$0xff]
          %v377 = vld [vmem:[%s246 + $0x8] sm:$0xff]
          %v378 = vsel %vm369, %v376, 0.0
          %v379 = vsel %vm369, %v377, 0.0
          %380 = vst [vmem:[%s251 + $0x60] sm:$0xff] %v378
          %381 = vst [vmem:[%s251 + $0x68] sm:$0xff] %v379
          %v382 = vld [vmem:[%s254] sm:$0xff]
          %v383 = vld [vmem:[%s254 + $0x8] sm:$0xff]
          %v384 = vsel %vm369, %v382, 0.0
          %v385 = vsel %vm369, %v383, 0.0
          %386 = vst [vmem:[%s259 + $0x60] sm:$0xff] %v384
          %387 = vst [vmem:[%s259 + $0x68] sm:$0xff] %v385
          %vm388 = vcmp.ge.s32.totalorder %v236, 112
          %vm389 = vcmp.lt.s32.totalorder %v236, 128
          %vm390 = vmand %vm388, %vm389
          %v391 = vld [vmem:[%s194] sm:$0xff]
          %v392 = vld [vmem:[%s194 + $0x8] sm:$0xff]
          %v393 = vsel %vm390, %v391, 0.0
          %v394 = vsel %vm390, %v392, 0.0
          %395 = vst [vmem:[#allocation2 + $0x70] sm:$0xff] %v393
          %396 = vst [vmem:[#allocation2 + $0x78] sm:$0xff] %v394
          %v397 = vld [vmem:[%s246] sm:$0xff]
          %v398 = vld [vmem:[%s246 + $0x8] sm:$0xff]
          %v399 = vsel %vm390, %v397, 0.0
          %v400 = vsel %vm390, %v398, 0.0
          %401 = vst [vmem:[%s251 + $0x70] sm:$0xff] %v399
          %402 = vst [vmem:[%s251 + $0x78] sm:$0xff] %v400
          %v403 = vld [vmem:[%s254] sm:$0xff]
          %v404 = vld [vmem:[%s254 + $0x8] sm:$0xff]
          %v405 = vsel %vm390, %v403, 0.0
          %v406 = vsel %vm390, %v404, 0.0
          %407 = vst [vmem:[%s259 + $0x70] sm:$0xff] %v405
          %408 = vst [vmem:[%s259 + $0x78] sm:$0xff] %v406
        $region40: #{tpu_custom_call.1} parent=31 // pred_fallthru
          _
        %v409 = vld [vmem:[%s230] sm:$0x1f]
        %v410 = vld [vmem:[%s2] sm:$0xff]
        %vm411 = vcmask 39936
        %v413 = vsel %vm411, %v410, 0
        %vm415 = vcmask 1044480
        %v417 = vsel %vm415, %v409, 0
        %419 = vmatprep.subr.mxu0 0.0
        %420 = vmatpush1.msra.mxu0 %v417
        %421 = vmatprep.subr.mxu0 0.0
        %422 = vmatpush1.msra.mxu0 0.0
        %423 = vmatprep.subr.mxu0 0.0
        %424 = vmatpush1.msra.mxu0 0.0
        %425 = vmatprep.subr.mxu0 0.0
        %426 = vmatpush1.msra.mxu0 0.0
        %427 = vmatprep.subr.mxu0 0.0
        %428 = vmatpush1.msra.mxu0 0.0
        %429 = vmatprep.subr.mxu0 0.0
        %430 = vmatpush1.msra.mxu0 0.0
        %431 = vmatprep.subr.mxu0 0.0
        %432 = vmatpush1.msra.mxu0 0.0
        %433 = vmatprep.subr.mxu0 0.0
        %434 = vmatpush1.msra.mxu0 0.0
        %435 = vmatprep.subr.mxu0 0.0
        %436 = vmatpush1.msra.mxu0 0.0
        %437 = vmatprep.subr.mxu0 0.0
        %438 = vmatpush1.msra.mxu0 0.0
        %439 = vmatprep.subr.mxu0 0.0
        %440 = vmatpush1.msra.mxu0 0.0
        %441 = vmatprep.subr.mxu0 0.0
        %442 = vmatpush1.msra.mxu0 0.0
        %443 = vmatprep.subr.mxu0 0.0
        %444 = vmatpush1.msra.mxu0 0.0
        %445 = vmatprep.subr.mxu0 0.0
        %446 = vmatpush1.msra.mxu0 0.0
        %447 = vmatprep.subr.mxu0 0.0
        %448 = vmatpush1.msra.mxu0 0.0
        %449 = vmatprep.subr.mxu0 0.0
        %450 = vmatpush1.msra.mxu0 0.0
        %451 = vmatprep.subr.mxu0 0.0
        %452 = vmatpush1.msra.mxu0 0.0
        %453 = vmatprep.subr.mxu0 0.0
        %454 = vmatpush1.msra.mxu0 0.0
        %455 = vmatprep.subr.mxu0 0.0
        %456 = vmatpush1.msra.mxu0 0.0
        %457 = vmatprep.subr.mxu0 0.0
        %458 = vmatpush1.msra.mxu0 0.0
        %459 = vmatprep.subr.mxu0 0.0
        %460 = vmatpush1.msra.mxu0 0.0
        %461 = vmatprep.subr.mxu0 0.0
        %462 = vmatpush1.msra.mxu0 0.0
        %463 = vmatprep.subr.mxu0 0.0
        %464 = vmatpush1.msra.mxu0 0.0
        %465 = vmatprep.subr.mxu0 0.0
        %466 = vmatpush1.msra.mxu0 0.0
        %467 = vmatprep.subr.mxu0 0.0
        %468 = vmatpush1.msra.mxu0 0.0
        %469 = vmatprep.subr.mxu0 0.0
        %470 = vmatpush1.msra.mxu0 0.0
        %471 = vmatprep.subr.mxu0 0.0
        %472 = vmatpush1.msra.mxu0 0.0
        %473 = vmatprep.subr.mxu0 0.0
        %474 = vmatpush1.msra.mxu0 0.0
        %475 = vmatprep.subr.mxu0 0.0
        %476 = vmatpush1.msra.mxu0 0.0
        %477 = vmatprep.subr.mxu0 0.0
        %478 = vmatpush1.msra.mxu0 0.0
        %479 = vmatprep.subr.mxu0 0.0
        %480 = vmatpush1.msra.mxu0 0.0
        %481 = vmatprep.subr.mxu0 0.0
        %482 = vmatpush1.msra.mxu0 0.0
        %483 = vmatprep.mubr.f32.mxu0 0.0
        %484 = vmatmul.mubr.f32.gmra.mrb[0].mxu0 %v413
        %v485 = vpop.f32.mrb[0].mxu0
        %v486 = vadd.f32 0.0, %v485
        %v487 = vpop.f32.mrb[0].mxu0
        %488 = vdwg.mxu0
        %v489 = vld [vmem:[#allocation2] sm:$0xff]
        %v490 = vld [vmem:[#allocation2 + $0x8] sm:$0xff]
        %v491 = vld [vmem:[#allocation2 + $0x10] sm:$0xff]
        %v492 = vld [vmem:[#allocation2 + $0x18] sm:$0xff]
        %v493 = vld [vmem:[#allocation2 + $0x20] sm:$0xff]
        %v494 = vld [vmem:[#allocation2 + $0x28] sm:$0xff]
        %v495 = vld [vmem:[#allocation2 + $0x30] sm:$0xff]
        %v496 = vld [vmem:[#allocation2 + $0x38] sm:$0xff]
        %v497 = vld [vmem:[#allocation2 + $0x40] sm:$0xff]
        %v498 = vld [vmem:[#allocation2 + $0x48] sm:$0xff]
        %v499 = vld [vmem:[#allocation2 + $0x50] sm:$0xff]
        %v500 = vld [vmem:[#allocation2 + $0x58] sm:$0xff]
        %v501 = vld [vmem:[#allocation2 + $0x60] sm:$0xff]
        %v502 = vld [vmem:[#allocation2 + $0x68] sm:$0xff]
        %v503 = vld [vmem:[#allocation2 + $0x70] sm:$0xff]
        %v504 = vld [vmem:[#allocation2 + $0x78] sm:$0xff]
        %v505 = vld [vmem:[%s2 + $0x8] sm:$0xff]
        %v507 = vsel %vm411, %v505, 0
        %509 = vmatprep.subr.mxu0 0.0
        %510 = vmatpush1.msra.mxu0 %v417
        %511 = vmatprep.subr.mxu0 0.0
        %512 = vmatpush1.msra.mxu0 0.0
        %513 = vmatprep.subr.mxu0 0.0
        %514 = vmatpush1.msra.mxu0 0.0
        %515 = vmatprep.subr.mxu0 0.0
        %516 = vmatpush1.msra.mxu0 0.0
        %517 = vmatprep.subr.mxu0 0.0
        %518 = vmatpush1.msra.mxu0 0.0
        %519 = vmatprep.subr.mxu0 0.0
        %520 = vmatpush1.msra.mxu0 0.0
        %521 = vmatprep.subr.mxu0 0.0
        %522 = vmatpush1.msra.mxu0 0.0
        %523 = vmatprep.subr.mxu0 0.0
        %524 = vmatpush1.msra.mxu0 0.0
        %525 = vmatprep.subr.mxu0 0.0
        %526 = vmatpush1.msra.mxu0 0.0
        %527 = vmatprep.subr.mxu0 0.0
        %528 = vmatpush1.msra.mxu0 0.0
        %529 = vmatprep.subr.mxu0 0.0
        %530 = vmatpush1.msra.mxu0 0.0
        %531 = vmatprep.subr.mxu0 0.0
        %532 = vmatpush1.msra.mxu0 0.0
        %533 = vmatprep.subr.mxu0 0.0
        %534 = vmatpush1.msra.mxu0 0.0
        %535 = vmatprep.subr.mxu0 0.0
        %536 = vmatpush1.msra.mxu0 0.0
        %537 = vmatprep.subr.mxu0 0.0
        %538 = vmatpush1.msra.mxu0 0.0
        %539 = vmatprep.subr.mxu0 0.0
        %540 = vmatpush1.msra.mxu0 0.0
        %541 = vmatprep.subr.mxu0 0.0
        %542 = vmatpush1.msra.mxu0 0.0
        %543 = vmatprep.subr.mxu0 0.0
        %544 = vmatpush1.msra.mxu0 0.0
        %545 = vmatprep.subr.mxu0 0.0
        %546 = vmatpush1.msra.mxu0 0.0
        %547 = vmatprep.subr.mxu0 0.0
        %548 = vmatpush1.msra.mxu0 0.0
        %549 = vmatprep.subr.mxu0 0.0
        %550 = vmatpush1.msra.mxu0 0.0
        %551 = vmatprep.subr.mxu0 0.0
        %552 = vmatpush1.msra.mxu0 0.0
        %553 = vmatprep.subr.mxu0 0.0
        %554 = vmatpush1.msra.mxu0 0.0
        %555 = vmatprep.subr.mxu0 0.0
        %556 = vmatpush1.msra.mxu0 0.0
        %557 = vmatprep.subr.mxu0 0.0
        %558 = vmatpush1.msra.mxu0 0.0
        %559 = vmatprep.subr.mxu0 0.0
        %560 = vmatpush1.msra.mxu0 0.0
        %561 = vmatprep.subr.mxu0 0.0
        %562 = vmatpush1.msra.mxu0 0.0
        %563 = vmatprep.subr.mxu0 0.0
        %564 = vmatpush1.msra.mxu0 0.0
        %565 = vmatprep.subr.mxu0 0.0
        %566 = vmatpush1.msra.mxu0 0.0
        %567 = vmatprep.subr.mxu0 0.0
        %568 = vmatpush1.msra.mxu0 0.0
        %569 = vmatprep.subr.mxu0 0.0
        %570 = vmatpush1.msra.mxu0 0.0
        %571 = vmatprep.subr.mxu0 0.0
        %572 = vmatpush1.msra.mxu0 0.0
        %573 = vmatprep.mubr.f32.mxu0 0.0
        %574 = vmatmul.mubr.f32.gmra.mrb[0].mxu0 %v507
        %v575 = vpop.f32.mrb[0].mxu0
        %v576 = vadd.f32 0.0, %v575
        %v577 = vpop.f32.mrb[0].mxu0
        %578 = vdwg.mxu0
        %s579 = scalar_lea.vmem [#allocation2], 128
        %v580 = vld [vmem:[%s579] sm:$0xff]
        %v581 = vld [vmem:[%s579 + $0x8] sm:$0xff]
        %v582 = vld [vmem:[%s579 + $0x10] sm:$0xff]
        %v583 = vld [vmem:[%s579 + $0x18] sm:$0xff]
        %v584 = vld [vmem:[%s579 + $0x20] sm:$0xff]
        %v585 = vld [vmem:[%s579 + $0x28] sm:$0xff]
        %v586 = vld [vmem:[%s579 + $0x30] sm:$0xff]
        %v587 = vld [vmem:[%s579 + $0x38] sm:$0xff]
        %v588 = vld [vmem:[%s579 + $0x40] sm:$0xff]
        %v589 = vld [vmem:[%s579 + $0x48] sm:$0xff]
        %v590 = vld [vmem:[%s579 + $0x50] sm:$0xff]
        %v591 = vld [vmem:[%s579 + $0x58] sm:$0xff]
        %v592 = vld [vmem:[%s579 + $0x60] sm:$0xff]
        %v593 = vld [vmem:[%s579 + $0x68] sm:$0xff]
        %v594 = vld [vmem:[%s579 + $0x70] sm:$0xff]
        %v595 = vld [vmem:[%s579 + $0x78] sm:$0xff]
        %596 = vmatprep.subr.mxu0 0.0
        %597 = vmatpush1.msra.mxu0 %v580
        %598 = vmatprep.subr.mxu0 0.0
        %599 = vmatpush1.msra.mxu0 %v581
        %600 = vmatprep.subr.mxu0 0.0
        %601 = vmatpush1.msra.mxu0 %v582
        %602 = vmatprep.subr.mxu0 0.0
        %603 = vmatpush1.msra.mxu0 %v583
        %604 = vmatprep.subr.mxu0 0.0
        %605 = vmatpush1.msra.mxu0 %v584
        %606 = vmatprep.subr.mxu0 0.0
        %607 = vmatpush1.msra.mxu0 %v585
        %608 = vmatprep.subr.mxu0 0.0
        %609 = vmatpush1.msra.mxu0 %v586
        %610 = vmatprep.subr.mxu0 0.0
        %611 = vmatpush1.msra.mxu0 %v587
        %612 = vmatprep.subr.mxu0 0.0
        %613 = vmatpush1.msra.mxu0 %v588
        %614 = vmatprep.subr.mxu0 0.0
        %615 = vmatpush1.msra.mxu0 %v589
        %616 = vmatprep.subr.mxu0 0.0
        %617 = vmatpush1.msra.mxu0 %v590
        %618 = vmatprep.subr.mxu0 0.0
        %619 = vmatpush1.msra.mxu0 %v591
        %620 = vmatprep.subr.mxu0 0.0
        %621 = vmatpush1.msra.mxu0 %v592
        %622 = vmatprep.subr.mxu0 0.0
        %623 = vmatpush1.msra.mxu0 %v593
        %624 = vmatprep.subr.mxu0 0.0
        %625 = vmatpush1.msra.mxu0 %v594
        %626 = vmatprep.subr.mxu0 0.0
        %627 = vmatpush1.msra.mxu0 %v595
        %628 = vmatprep.subr.mxu0 0.0
        %629 = vmatpush1.msra.mxu0 0.0
        %630 = vmatprep.subr.mxu0 0.0
        %631 = vmatpush1.msra.mxu0 0.0
        %632 = vmatprep.subr.mxu0 0.0
        %633 = vmatpush1.msra.mxu0 0.0
        %634 = vmatprep.subr.mxu0 0.0
        %635 = vmatpush1.msra.mxu0 0.0
        %636 = vmatprep.subr.mxu0 0.0
        %637 = vmatpush1.msra.mxu0 0.0
        %638 = vmatprep.subr.mxu0 0.0
        %639 = vmatpush1.msra.mxu0 0.0
        %640 = vmatprep.subr.mxu0 0.0
        %641 = vmatpush1.msra.mxu0 0.0
        %642 = vmatprep.subr.mxu0 0.0
        %643 = vmatpush1.msra.mxu0 0.0
        %644 = vmatprep.subr.mxu0 0.0
        %645 = vmatpush1.msra.mxu0 0.0
        %646 = vmatprep.subr.mxu0 0.0
        %647 = vmatpush1.msra.mxu0 0.0
        %648 = vmatprep.subr.mxu0 0.0
        %649 = vmatpush1.msra.mxu0 0.0
        %650 = vmatprep.subr.mxu0 0.0
        %651 = vmatpush1.msra.mxu0 0.0
        %652 = vmatprep.subr.mxu0 0.0
        %653 = vmatpush1.msra.mxu0 0.0
        %654 = vmatprep.subr.mxu0 0.0
        %655 = vmatpush1.msra.mxu0 0.0
        %656 = vmatprep.subr.mxu0 0.0
        %657 = vmatpush1.msra.mxu0 0.0
        %658 = vmatprep.subr.mxu0 0.0
        %659 = vmatpush1.msra.mxu0 0.0
        %660 = vmatprep.mubr.f32.mxu0 0.0
        %661 = vmatmul.mubr.f32.gmra.mrb[0].mxu0 %v576
        %v662 = vpop.f32.mrb[0].mxu0
        %v663 = vadd.f32 0.0, %v662
        %v664 = vpop.f32.mrb[0].mxu0
        %665 = vdwg.mxu0
        %666 = vmatprep.subr.mxu0 0.0
        %667 = vmatpush1.msra.mxu0 %v489
        %668 = vmatprep.subr.mxu0 0.0
        %669 = vmatpush1.msra.mxu0 %v490
        %670 = vmatprep.subr.mxu0 0.0
        %671 = vmatpush1.msra.mxu0 %v491
        %672 = vmatprep.subr.mxu0 0.0
        %673 = vmatpush1.msra.mxu0 %v492
        %674 = vmatprep.subr.mxu0 0.0
        %675 = vmatpush1.msra.mxu0 %v493
        %676 = vmatprep.subr.mxu0 0.0
        %677 = vmatpush1.msra.mxu0 %v494
        %678 = vmatprep.subr.mxu0 0.0
        %679 = vmatpush1.msra.mxu0 %v495
        %680 = vmatprep.subr.mxu0 0.0
        %681 = vmatpush1.msra.mxu0 %v496
        %682 = vmatprep.subr.mxu0 0.0
        %683 = vmatpush1.msra.mxu0 %v497
        %684 = vmatprep.subr.mxu0 0.0
        %685 = vmatpush1.msra.mxu0 %v498
        %686 = vmatprep.subr.mxu0 0.0
        %687 = vmatpush1.msra.mxu0 %v499
        %688 = vmatprep.subr.mxu0 0.0
        %689 = vmatpush1.msra.mxu0 %v500
        %690 = vmatprep.subr.mxu0 0.0
        %691 = vmatpush1.msra.mxu0 %v501
        %692 = vmatprep.subr.mxu0 0.0
        %693 = vmatpush1.msra.mxu0 %v502
        %694 = vmatprep.subr.mxu0 0.0
        %695 = vmatpush1.msra.mxu0 %v503
        %696 = vmatprep.subr.mxu0 0.0
        %697 = vmatpush1.msra.mxu0 %v504
        %698 = vmatprep.subr.mxu0 0.0
        %699 = vmatpush1.msra.mxu0 0.0
        %700 = vmatprep.subr.mxu0 0.0
        %701 = vmatpush1.msra.mxu0 0.0
        %702 = vmatprep.subr.mxu0 0.0
        %703 = vmatpush1.msra.mxu0 0.0
        %704 = vmatprep.subr.mxu0 0.0
        %705 = vmatpush1.msra.mxu0 0.0
        %706 = vmatprep.subr.mxu0 0.0
        %707 = vmatpush1.msra.mxu0 0.0
        %708 = vmatprep.subr.mxu0 0.0
        %709 = vmatpush1.msra.mxu0 0.0
        %710 = vmatprep.subr.mxu0 0.0
        %711 = vmatpush1.msra.mxu0 0.0
        %712 = vmatprep.subr.mxu0 0.0
        %713 = vmatpush1.msra.mxu0 0.0
        %714 = vmatprep.subr.mxu0 0.0
        %715 = vmatpush1.msra.mxu0 0.0
        %716 = vmatprep.subr.mxu0 0.0
        %717 = vmatpush1.msra.mxu0 0.0
        %718 = vmatprep.subr.mxu0 0.0
        %719 = vmatpush1.msra.mxu0 0.0
        %720 = vmatprep.subr.mxu0 0.0
        %721 = vmatpush1.msra.mxu0 0.0
        %722 = vmatprep.subr.mxu0 0.0
        %723 = vmatpush1.msra.mxu0 0.0
        %724 = vmatprep.subr.mxu0 0.0
        %725 = vmatpush1.msra.mxu0 0.0
        %726 = vmatprep.subr.mxu0 0.0
        %727 = vmatpush1.msra.mxu0 0.0
        %728 = vmatprep.subr.mxu0 0.0
        %729 = vmatpush1.msra.mxu0 0.0
        %730 = vmatprep.mubr.f32.mxu0 0.0
        %731 = vmatmul.mubr.f32.gmra.mrb[0].mxu0 %v486
        %v732 = vpop.f32.mrb[0].mxu0
        %v733 = vadd.f32 %v663, %v732
        %v734 = vpop.f32.mrb[0].mxu0
        %735 = vdwg.mxu0
        %v736 = vld [vmem:[%s2 + $0x10] sm:$0xff]
        %v738 = vsel %vm411, %v736, 0
        %740 = vmatprep.subr.mxu0 0.0
        %741 = vmatpush1.msra.mxu0 %v417
        %742 = vmatprep.subr.mxu0 0.0
        %743 = vmatpush1.msra.mxu0 0.0
        %744 = vmatprep.subr.mxu0 0.0
        %745 = vmatpush1.msra.mxu0 0.0
        %746 = vmatprep.subr.mxu0 0.0
        %747 = vmatpush1.msra.mxu0 0.0
        %748 = vmatprep.subr.mxu0 0.0
        %749 = vmatpush1.msra.mxu0 0.0
        %750 = vmatprep.subr.mxu0 0.0
        %751 = vmatpush1.msra.mxu0 0.0
        %752 = vmatprep.subr.mxu0 0.0
        %753 = vmatpush1.msra.mxu0 0.0
        %754 = vmatprep.subr.mxu0 0.0
        %755 = vmatpush1.msra.mxu0 0.0
        %756 = vmatprep.subr.mxu0 0.0
        %757 = vmatpush1.msra.mxu0 0.0
        %758 = vmatprep.subr.mxu0 0.0
        %759 = vmatpush1.msra.mxu0 0.0
        %760 = vmatprep.subr.mxu0 0.0
        %761 = vmatpush1.msra.mxu0 0.0
        %762 = vmatprep.subr.mxu0 0.0
        %763 = vmatpush1.msra.mxu0 0.0
        %764 = vmatprep.subr.mxu0 0.0
        %765 = vmatpush1.msra.mxu0 0.0
        %766 = vmatprep.subr.mxu0 0.0
        %767 = vmatpush1.msra.mxu0 0.0
        %768 = vmatprep.subr.mxu0 0.0
        %769 = vmatpush1.msra.mxu0 0.0
        %770 = vmatprep.subr.mxu0 0.0
        %771 = vmatpush1.msra.mxu0 0.0
        %772 = vmatprep.subr.mxu0 0.0
        %773 = vmatpush1.msra.mxu0 0.0
        %774 = vmatprep.subr.mxu0 0.0
        %775 = vmatpush1.msra.mxu0 0.0
        %776 = vmatprep.subr.mxu0 0.0
        %777 = vmatpush1.msra.mxu0 0.0
        %778 = vmatprep.subr.mxu0 0.0
        %779 = vmatpush1.msra.mxu0 0.0
        %780 = vmatprep.subr.mxu0 0.0
        %781 = vmatpush1.msra.mxu0 0.0
        %782 = vmatprep.subr.mxu0 0.0
        %783 = vmatpush1.msra.mxu0 0.0
        %784 = vmatprep.subr.mxu0 0.0
        %785 = vmatpush1.msra.mxu0 0.0
        %786 = vmatprep.subr.mxu0 0.0
        %787 = vmatpush1.msra.mxu0 0.0
        %788 = vmatprep.subr.mxu0 0.0
        %789 = vmatpush1.msra.mxu0 0.0
        %790 = vmatprep.subr.mxu0 0.0
        %791 = vmatpush1.msra.mxu0 0.0
        %792 = vmatprep.subr.mxu0 0.0
        %793 = vmatpush1.msra.mxu0 0.0
        %794 = vmatprep.subr.mxu0 0.0
        %795 = vmatpush1.msra.mxu0 0.0
        %796 = vmatprep.subr.mxu0 0.0
        %797 = vmatpush1.msra.mxu0 0.0
        %798 = vmatprep.subr.mxu0 0.0
        %799 = vmatpush1.msra.mxu0 0.0
        %800 = vmatprep.subr.mxu0 0.0
        %801 = vmatpush1.msra.mxu0 0.0
        %802 = vmatprep.subr.mxu0 0.0
        %803 = vmatpush1.msra.mxu0 0.0
        %804 = vmatprep.mubr.f32.mxu0 0.0
        %805 = vmatmul.mubr.f32.gmra.mrb[0].mxu0 %v738
        %v806 = vpop.f32.mrb[0].mxu0
        %v807 = vadd.f32 0.0, %v806
        %v808 = vpop.f32.mrb[0].mxu0
        %809 = vdwg.mxu0
        %s810 = scalar_lea.vmem [#allocation2], 256
        %v811 = vld [vmem:[%s810] sm:$0xff]
        %v812 = vld [vmem:[%s810 + $0x8] sm:$0xff]
        %v813 = vld [vmem:[%s810 + $0x10] sm:$0xff]
        %v814 = vld [vmem:[%s810 + $0x18] sm:$0xff]
        %v815 = vld [vmem:[%s810 + $0x20] sm:$0xff]
        %v816 = vld [vmem:[%s810 + $0x28] sm:$0xff]
        %v817 = vld [vmem:[%s810 + $0x30] sm:$0xff]
        %v818 = vld [vmem:[%s810 + $0x38] sm:$0xff]
        %v819 = vld [vmem:[%s810 + $0x40] sm:$0xff]
        %v820 = vld [vmem:[%s810 + $0x48] sm:$0xff]
        %v821 = vld [vmem:[%s810 + $0x50] sm:$0xff]
        %v822 = vld [vmem:[%s810 + $0x58] sm:$0xff]
        %v823 = vld [vmem:[%s810 + $0x60] sm:$0xff]
        %v824 = vld [vmem:[%s810 + $0x68] sm:$0xff]
        %v825 = vld [vmem:[%s810 + $0x70] sm:$0xff]
        %v826 = vld [vmem:[%s810 + $0x78] sm:$0xff]
        %827 = vmatprep.subr.mxu0 0.0
        %828 = vmatpush1.msra.mxu0 %v811
        %829 = vmatprep.subr.mxu0 0.0
        %830 = vmatpush1.msra.mxu0 %v812
        %831 = vmatprep.subr.mxu0 0.0
        %832 = vmatpush1.msra.mxu0 %v813
        %833 = vmatprep.subr.mxu0 0.0
        %834 = vmatpush1.msra.mxu0 %v814
        %835 = vmatprep.subr.mxu0 0.0
        %836 = vmatpush1.msra.mxu0 %v815
        %837 = vmatprep.subr.mxu0 0.0
        %838 = vmatpush1.msra.mxu0 %v816
        %839 = vmatprep.subr.mxu0 0.0
        %840 = vmatpush1.msra.mxu0 %v817
        %841 = vmatprep.subr.mxu0 0.0
        %842 = vmatpush1.msra.mxu0 %v818
        %843 = vmatprep.subr.mxu0 0.0
        %844 = vmatpush1.msra.mxu0 %v819
        %845 = vmatprep.subr.mxu0 0.0
        %846 = vmatpush1.msra.mxu0 %v820
        %847 = vmatprep.subr.mxu0 0.0
        %848 = vmatpush1.msra.mxu0 %v821
        %849 = vmatprep.subr.mxu0 0.0
        %850 = vmatpush1.msra.mxu0 %v822
        %851 = vmatprep.subr.mxu0 0.0
        %852 = vmatpush1.msra.mxu0 %v823
        %853 = vmatprep.subr.mxu0 0.0
        %854 = vmatpush1.msra.mxu0 %v824
        %855 = vmatprep.subr.mxu0 0.0
        %856 = vmatpush1.msra.mxu0 %v825
        %857 = vmatprep.subr.mxu0 0.0
        %858 = vmatpush1.msra.mxu0 %v826
        %859 = vmatprep.subr.mxu0 0.0
        %860 = vmatpush1.msra.mxu0 0.0
        %861 = vmatprep.subr.mxu0 0.0
        %862 = vmatpush1.msra.mxu0 0.0
        %863 = vmatprep.subr.mxu0 0.0
        %864 = vmatpush1.msra.mxu0 0.0
        %865 = vmatprep.subr.mxu0 0.0
        %866 = vmatpush1.msra.mxu0 0.0
        %867 = vmatprep.subr.mxu0 0.0
        %868 = vmatpush1.msra.mxu0 0.0
        %869 = vmatprep.subr.mxu0 0.0
        %870 = vmatpush1.msra.mxu0 0.0
        %871 = vmatprep.subr.mxu0 0.0
        %872 = vmatpush1.msra.mxu0 0.0
        %873 = vmatprep.subr.mxu0 0.0
        %874 = vmatpush1.msra.mxu0 0.0
        %875 = vmatprep.subr.mxu0 0.0
        %876 = vmatpush1.msra.mxu0 0.0
        %877 = vmatprep.subr.mxu0 0.0
        %878 = vmatpush1.msra.mxu0 0.0
        %879 = vmatprep.subr.mxu0 0.0
        %880 = vmatpush1.msra.mxu0 0.0
        %881 = vmatprep.subr.mxu0 0.0
        %882 = vmatpush1.msra.mxu0 0.0
        %883 = vmatprep.subr.mxu0 0.0
        %884 = vmatpush1.msra.mxu0 0.0
        %885 = vmatprep.subr.mxu0 0.0
        %886 = vmatpush1.msra.mxu0 0.0
        %887 = vmatprep.subr.mxu0 0.0
        %888 = vmatpush1.msra.mxu0 0.0
        %889 = vmatprep.subr.mxu0 0.0
        %890 = vmatpush1.msra.mxu0 0.0
        %891 = vmatprep.mubr.f32.mxu0 0.0
        %892 = vmatmul.mubr.f32.gmra.mrb[0].mxu0 %v807
        %v893 = vpop.f32.mrb[0].mxu0
        %v894 = vadd.f32 0.0, %v893
        %v895 = vpop.f32.mrb[0].mxu0
        %896 = vdwg.mxu0
        %v897 = vadd.f32 %v733, %v894
        %898 = vst [vmem:[%s223] sm:$0xff] %v897
        %s899 = sand.u32 %s117, 1
        %s900 = scalar_lea.sflag [#allocation5], %s899
        %s901 = sand.u32 %s117, 1
        %s902 = smul.addr %s901, 8
        %s903 = scalar_lea.vmem [#allocation6], %s902
        // Predicated region
        $region41: #{tpu_custom_call.1} parent=31 // pred_check
          %p904 = pneg %p127
        $region42: #{tpu_custom_call.1} parent=31 // pred_check_branch
          %906 = sbr.rel (%p904) target = $region44
        $region43: #{tpu_custom_call.1} parent=31 // pred_region
          %s908 = ssub.s32 128, 128
          %909 = vsyncadd %s900, %s908
          %s910 = sadd.s32 %s25, %s24
          %s911 = smul.addr %s910, 128
          %s912 = scalar_lea.hbm %s3, %s911
          %s914 = sshll.u32 %s903, 4
          %s915 = int_to_ptr.vmem [resolvable:$true] %s914
          %917 = dma.vmem_to_hbm [thread:$0]  %s915, 128, %s912, %s900
        $region44: #{tpu_custom_call.1} parent=31 // pred_fallthru
          _
      $region32: #{tpu_custom_call.1} parent=5 // pred_fallthru
        _
      %p918 = scmp.le.s32.totalorder 2, %s15
      // Predicated region
      $region45: #{tpu_custom_call.1} parent=5 // pred_check
        %p919 = pneg %p918
      $region46: #{tpu_custom_call.1} parent=5 // pred_check_branch
        %921 = sbr.rel (%p919) target = $region48
      $region47: #{tpu_custom_call.1} parent=5 // pred_region
        %s922 = ssub.s32 %s15, 2
        // Predicated region
        $region49: #{tpu_custom_call.1} parent=47 // pred_check
          %p923 = pneg %p133
        $region50: #{tpu_custom_call.1} parent=47 // pred_check_branch
          %925 = sbr.rel (%p923) target = $region52
        $region51: #{tpu_custom_call.1} parent=47 // pred_region
          %s926 = sand.u32 %s118, 1
          %s927 = scalar_lea.sflag [#allocation5], %s926
          %s928 = sand.u32 %s118, 1
          %s929 = smul.addr %s928, 8
          %s930 = scalar_lea.vmem [#allocation6], %s929
          %931 = dma.done %s927, 128
        $region52: #{tpu_custom_call.1} parent=47 // pred_fallthru
          _
      $region48: #{tpu_custom_call.1} parent=5 // pred_fallthru
        _
    $region6: #{tpu_custom_call.1} parent=1 // loop_footer
      %s19 = sadd.s32 1, %s15
    $region7: #{tpu_custom_call.1} parent=1 // loop_footer_branch
      %14 = sbr.rel target = $region3
    $region8: #{tpu_custom_call.1} parent=1 // loop_exit
      _
    %932 = vsyncpa [#allocation4], 1
    %s933 = scalar_lea.sflag [#allocation4], 1
    %934 = vsyncpa %s933, 1
    %935 = vsyncpa [#allocation5], 1
    %s936 = scalar_lea.sflag [#allocation5], 1
    %937 = vsyncpa %s936, 1

</llo_original>
